<compile_context>
chip_gen: v5e
topology: v5e:2x2
jax: 0.10.0
libtpu: 0.0.40
codegen_flags: <defaults>
</compile_context>

<pallas_src>
import functools

import jax
import jax.numpy as jnp
from jax.experimental import pallas as pl
from jax.experimental.pallas import tpu as pltpu

INPUT_DIM = 3
LATENT_DIM = 128
TM_MAX = 2048      # max row tile (amortizes per-step overhead & MXU weight pushes)
ROW_ALIGN = 256    # adaptive padding granularity


def _round_up(x, m):
    return ((x + m - 1) // m) * m


def _choose_tile(m):
    """Pick (row_tile, padded_rows).

    Pads to a multiple of 256 (not a full tile) so small clouds don't waste MXU
    row-feeds, caps the tile at TM_MAX, and prefers >= 2 grid steps so the
    "parallel" axis can be sharded across v7x's two TensorCores.
    """
    m_round = _round_up(max(m, 1), ROW_ALIGN)
    tm = min(TM_MAX, m_round)
    if m_round // tm < 2 and m_round >= 2 * ROW_ALIGN:
        tm = _round_up(m_round // 2, ROW_ALIGN)
    m_pad = _round_up(m_round, tm)
    return tm, m_pad


def _bf16_epilogue_ok():
    """bf16 VALU exists on v6e / v7x; v5e and older must keep f32 epilogues."""
    try:
        kind = jax.devices()[0].device_kind.lower()
    except Exception:
        return False
    return ("v6" in kind) or ("v7" in kind) or ("7x" in kind)


def _ae_kernel(x_ref,
               w1, b1,        # 3 -> 256   (VPU broadcast FMAs)
               w2, b2,        # 256 -> 128 (bf16 weights, MXU)
               w34, b34,      # 128 -> 128 (folded latent + decoder-1, bf16, MXU)
               w5, b5,        # 128 -> 256 (bf16, MXU)
               w6t, b6,       # 256 -> 3   (VPU mult + XLU lane-reduce; w6t is (3,256) f32)
               o_ref,
               *, mxu_out_dtype):
    cdt = w1.dtype                                   # epilogue dtype (f32 v5e, bf16 v6e/v7x)
    x = x_ref[...].astype(cdt)                       # (TM, 3)
    w1v = w1[...]                                    # (3, 256)

    # Layer 1 (3 -> 256): three broadcast multiply-adds on the VPU (K=3 too thin for MXU).
    h = (x[:, 0:1] * w1v[0:1, :]
         + x[:, 1:2] * w1v[1:2, :]
         + x[:, 2:3] * w1v[2:3, :]
         + b1[...])
    h = jnp.maximum(h, 0).astype(jnp.bfloat16)

    # Three dense MXU layers; bias-add + ReLU + cast fused in the epilogue dtype.
    h = jnp.maximum(
        jnp.dot(h, w2[...], preferred_element_type=mxu_out_dtype) + b2[...],
        0).astype(jnp.bfloat16)
    h = jnp.maximum(
        jnp.dot(h, w34[...], preferred_element_type=mxu_out_dtype) + b34[...],
        0).astype(jnp.bfloat16)
    h = jnp.maximum(
        jnp.dot(h, w5[...], preferred_element_type=mxu_out_dtype) + b5[...],
        0).astype(jnp.bfloat16)

    # Output layer (256 -> 3) OFF the MXU: three dot-product reductions in f32.
    hf = h.astype(jnp.float32)                       # (TM, 256)
    w6f = w6t[...]                                   # (3, 256) f32
    o0 = jnp.sum(hf * w6f[0:1, :], axis=-1, keepdims=True)
    o1 = jnp.sum(hf * w6f[1:2, :], axis=-1, keepdims=True)
    o2 = jnp.sum(hf * w6f[2:3, :], axis=-1, keepdims=True)
    # Keep the lane-sparse (TM,3) masked store; padding the output to 128 lanes
    # would only add HBM write traffic for no benefit.
    o_ref[...] = jnp.concatenate([o0, o1, o2], axis=-1) + b6[...]


def point_cloud_autoencoder(x, params):
    """x: (..., 3) float32. Returns the reconstruction with the same shape."""
    orig_shape = x.shape
    x_flat = x.reshape(-1, INPUT_DIM).astype(jnp.float32)
    m = x_flat.shape[0]

    tm, m_pad = _choose_tile(m)
    if m_pad != m:
        x_flat = jnp.pad(x_flat, ((0, m_pad - m), (0, 0)))

    (w1, b1), (w2, b2), (w3, b3), (w4, b4), (w5, b5), (w6, b6) = params

    # Fold the latent layer into the first decoder layer (no ReLU between them).
    w34 = w3 @ w4
    b34 = b3 @ w4 + b4

    use_bf16 = _bf16_epilogue_ok()
    edt = jnp.bfloat16 if use_bf16 else jnp.float32   # epilogue / VPU dtype

    kernel_params = [
        w1.astype(edt), b1.astype(edt),                     # layer-1 VPU path
        w2.astype(jnp.bfloat16), b2.astype(edt),
        w34.astype(jnp.bfloat16), b34.astype(edt),
        w5.astype(jnp.bfloat16), b5.astype(edt),
        w6.T.astype(jnp.float32), b6.astype(jnp.float32),   # output layer (VPU/XLU, f32)
    ]

    in_specs = [pl.BlockSpec((tm, INPUT_DIM), lambda i: (i, 0))]
    for p in kernel_params:
        # Tiny parameter arrays: one block, identical for every grid step
        # (Pallas skips the re-copy when the block index does not change).
        in_specs.append(pl.BlockSpec(p.shape, lambda i: (0, 0)))

    kernel = functools.partial(_ae_kernel, mxu_out_dtype=edt)

    out = pl.pallas_call(
        kernel,
        out_shape=jax.ShapeDtypeStruct((m_pad, INPUT_DIM), jnp.float32),
        grid_spec=pltpu.PrefetchScalarGridSpec(
            num_scalar_prefetch=0,
            grid=(m_pad // tm,),
            in_specs=in_specs,
            out_specs=pl.BlockSpec((tm, INPUT_DIM), lambda i: (i, 0)),
        ),
        compiler_params=pltpu.CompilerParams(
            dimension_semantics=("parallel",),
            # Headroom for the larger row tile; comfortably under v7x's 64 MiB.
            vmem_limit_bytes=48 * 1024 * 1024,
        ),
    )(x_flat, *kernel_params)

    return out[:m].reshape(orig_shape)


def init_params(key, input_dim=INPUT_DIM, latent_dim=LATENT_DIM):
    """Deterministic init mirroring nn.Linear defaults: U(-1/sqrt(fan_in), +)."""
    dims = [(input_dim, 256), (256, 128), (128, latent_dim),      # encoder
            (latent_dim, 128), (128, 256), (256, input_dim)]      # decoder
    params = []
    for (fan_in, fan_out) in dims:
        key, kw, kb = jax.random.split(key, 3)
        bound = 1.0 / jnp.sqrt(jnp.float32(fan_in))
        w = jax.random.uniform(kw, (fan_in, fan_out), jnp.float32, -bound, bound)
        b = jax.random.uniform(kb, (1, fan_out), jnp.float32, -bound, bound)
        params.append((w, b))
    return params


def reference_forward(x, params):
    """Pure-JAX f32 reference matching the original PyTorch forward."""
    h = x.reshape(-1, INPUT_DIM)
    for idx, (w, b) in enumerate(params):
        h = h @ w + b
        if idx not in (2, 5):  # no ReLU after latent layer and output layer
            h = jnp.maximum(h, 0.0)
    return h.reshape(x.shape)


if __name__ == "__main__":
    key = jax.random.PRNGKey(0)
    k_x, k_p = jax.random.split(key)

    # point cloud: batch=2, N=128 points, 3 coords
    x = jax.random.normal(k_x, (2, 128, 3), dtype=jnp.float32)
    params = init_params(k_p)

    y = point_cloud_autoencoder(x, params)
    y = jax.block_until_ready(y)

    y_ref = reference_forward(x, params)
    assert y.shape == x.shape
    # bf16 MXU operands (+ bf16 epilogues on v6e/v7x) and the folded w3@w4 change
    # rounding slightly -> loosened tolerance.
    assert jnp.allclose(y, y_ref, atol=5e-2, rtol=5e-2), "mismatch vs reference"

    print("KERNEL_OK")
</pallas_src>

<mosaic_0001>
module attributes {stable_mosaic.version = 11 : i64} {
  func.func @_ae_kernel(%arg0: i32, %arg1: memref<256x3xf32, #tpu.memory_space<vmem>>, %arg2: memref<3x256xf32, #tpu.memory_space<vmem>>, %arg3: memref<1x256xf32, #tpu.memory_space<vmem>>, %arg4: memref<256x128xbf16, #tpu.memory_space<vmem>>, %arg5: memref<1x128xf32, #tpu.memory_space<vmem>>, %arg6: memref<128x128xbf16, #tpu.memory_space<vmem>>, %arg7: memref<1x128xf32, #tpu.memory_space<vmem>>, %arg8: memref<128x256xbf16, #tpu.memory_space<vmem>>, %arg9: memref<1x256xf32, #tpu.memory_space<vmem>>, %arg10: memref<3x256xf32, #tpu.memory_space<vmem>>, %arg11: memref<1x3xf32, #tpu.memory_space<vmem>>, %arg12: memref<256x3xf32, #tpu.memory_space<vmem>>) attributes {dimension_semantics = [#tpu.dimension_semantics<parallel>], iteration_bounds = array<i64: 1>, scalar_prefetch = 0 : i64, scratch_operands = 0 : i64, tpu.core_type = #tpu.core_type<tc>, window_params = [{transform_indices = @transform_0, window_bounds = array<i64: 256, 3>}, {pipeline_mode = #tpu.pipeline_mode<synchronous>, transform_indices = @transform_1, window_bounds = array<i64: 3, 256>}, {pipeline_mode = #tpu.pipeline_mode<synchronous>, transform_indices = @transform_2, window_bounds = array<i64: 1, 256>}, {pipeline_mode = #tpu.pipeline_mode<synchronous>, transform_indices = @transform_3, window_bounds = array<i64: 256, 128>}, {pipeline_mode = #tpu.pipeline_mode<synchronous>, transform_indices = @transform_4, window_bounds = array<i64: 1, 128>}, {pipeline_mode = #tpu.pipeline_mode<synchronous>, transform_indices = @transform_5, window_bounds = array<i64: 128, 128>}, {pipeline_mode = #tpu.pipeline_mode<synchronous>, transform_indices = @transform_6, window_bounds = array<i64: 1, 128>}, {pipeline_mode = #tpu.pipeline_mode<synchronous>, transform_indices = @transform_7, window_bounds = array<i64: 128, 256>}, {pipeline_mode = #tpu.pipeline_mode<synchronous>, transform_indices = @transform_8, window_bounds = array<i64: 1, 256>}, {pipeline_mode = #tpu.pipeline_mode<synchronous>, transform_indices = @transform_9, window_bounds = array<i64: 3, 256>}, {pipeline_mode = #tpu.pipeline_mode<synchronous>, transform_indices = @transform_10, window_bounds = array<i64: 1, 3>}, {transform_indices = @transform_11, window_bounds = array<i64: 256, 3>}]} {
    %c0 = arith.constant 0 : index
    %c0_0 = arith.constant 0 : index
    %0 = vector.load %arg1[%c0, %c0_0] : memref<256x3xf32, #tpu.memory_space<vmem>>, vector<256x3xf32>
    %c0_1 = arith.constant 0 : index
    %c0_2 = arith.constant 0 : index
    %1 = vector.load %arg2[%c0_1, %c0_2] : memref<3x256xf32, #tpu.memory_space<vmem>>, vector<3x256xf32>
    %2 = vector.extract_strided_slice %0 {offsets = [0, 0], sizes = [256, 1], strides = [1, 1]} : vector<256x3xf32> to vector<256x1xf32>
    %3 = vector.extract_strided_slice %1 {offsets = [0, 0], sizes = [1, 256], strides = [1, 1]} : vector<3x256xf32> to vector<1x256xf32>
    %4 = vector.broadcast %2 : vector<256x1xf32> to vector<256x256xf32>
    %5 = vector.broadcast %3 : vector<1x256xf32> to vector<256x256xf32>
    %6 = arith.mulf %4, %5 : vector<256x256xf32>
    %7 = vector.extract_strided_slice %0 {offsets = [0, 1], sizes = [256, 1], strides = [1, 1]} : vector<256x3xf32> to vector<256x1xf32>
    %8 = vector.extract_strided_slice %1 {offsets = [1, 0], sizes = [1, 256], strides = [1, 1]} : vector<3x256xf32> to vector<1x256xf32>
    %9 = vector.broadcast %7 : vector<256x1xf32> to vector<256x256xf32>
    %10 = vector.broadcast %8 : vector<1x256xf32> to vector<256x256xf32>
    %11 = arith.mulf %9, %10 : vector<256x256xf32>
    %12 = arith.addf %6, %11 : vector<256x256xf32>
    %13 = vector.extract_strided_slice %0 {offsets = [0, 2], sizes = [256, 1], strides = [1, 1]} : vector<256x3xf32> to vector<256x1xf32>
    %14 = vector.extract_strided_slice %1 {offsets = [2, 0], sizes = [1, 256], strides = [1, 1]} : vector<3x256xf32> to vector<1x256xf32>
    %15 = vector.broadcast %13 : vector<256x1xf32> to vector<256x256xf32>
    %16 = vector.broadcast %14 : vector<1x256xf32> to vector<256x256xf32>
    %17 = arith.mulf %15, %16 : vector<256x256xf32>
    %18 = arith.addf %12, %17 : vector<256x256xf32>
    %c0_3 = arith.constant 0 : index
    %c0_4 = arith.constant 0 : index
    %19 = vector.load %arg3[%c0_3, %c0_4] : memref<1x256xf32, #tpu.memory_space<vmem>>, vector<1x256xf32>
    %20 = vector.broadcast %19 : vector<1x256xf32> to vector<256x256xf32>
    %21 = arith.addf %18, %20 : vector<256x256xf32>
    %cst = arith.constant 0.000000e+00 : f32
    %22 = vector.broadcast %cst : f32 to vector<256x256xf32>
    %23 = arith.maximumf %21, %22 : vector<256x256xf32>
    %24 = arith.truncf %23 : vector<256x256xf32> to vector<256x256xbf16>
    %c0_5 = arith.constant 0 : index
    %c0_6 = arith.constant 0 : index
    %25 = vector.load %arg4[%c0_5, %c0_6] : memref<256x128xbf16, #tpu.memory_space<vmem>>, vector<256x128xbf16>
    %cst_7 = arith.constant dense<0.000000e+00> : vector<256x128xf32>
    %26 = tpu.matmul %24, %25, %cst_7 {dimension_numbers = #tpu.dot_dimension_numbers<[1], [0], [0], [1], [0, 0, 1, 1], [], []>} : vector<256x256xbf16>, vector<256x128xbf16>, vector<256x128xf32> -> vector<256x128xf32>
    %c0_8 = arith.constant 0 : index
    %c0_9 = arith.constant 0 : index
    %27 = vector.load %arg5[%c0_8, %c0_9] : memref<1x128xf32, #tpu.memory_space<vmem>>, vector<1x128xf32>
    %28 = vector.broadcast %27 : vector<1x128xf32> to vector<256x128xf32>
    %29 = arith.addf %26, %28 : vector<256x128xf32>
    %cst_10 = arith.constant 0.000000e+00 : f32
    %30 = vector.broadcast %cst_10 : f32 to vector<256x128xf32>
    %31 = arith.maximumf %29, %30 : vector<256x128xf32>
    %32 = arith.truncf %31 : vector<256x128xf32> to vector<256x128xbf16>
    %c0_11 = arith.constant 0 : index
    %c0_12 = arith.constant 0 : index
    %33 = vector.load %arg6[%c0_11, %c0_12] : memref<128x128xbf16, #tpu.memory_space<vmem>>, vector<128x128xbf16>
    %cst_13 = arith.constant dense<0.000000e+00> : vector<256x128xf32>
    %34 = tpu.matmul %32, %33, %cst_13 {dimension_numbers = #tpu.dot_dimension_numbers<[1], [0], [0], [1], [0, 0, 1, 1], [], []>} : vector<256x128xbf16>, vector<128x128xbf16>, vector<256x128xf32> -> vector<256x128xf32>
    %c0_14 = arith.constant 0 : index
    %c0_15 = arith.constant 0 : index
    %35 = vector.load %arg7[%c0_14, %c0_15] : memref<1x128xf32, #tpu.memory_space<vmem>>, vector<1x128xf32>
    %36 = vector.broadcast %35 : vector<1x128xf32> to vector<256x128xf32>
    %37 = arith.addf %34, %36 : vector<256x128xf32>
    %cst_16 = arith.constant 0.000000e+00 : f32
    %38 = vector.broadcast %cst_16 : f32 to vector<256x128xf32>
    %39 = arith.maximumf %37, %38 : vector<256x128xf32>
    %40 = arith.truncf %39 : vector<256x128xf32> to vector<256x128xbf16>
    %c0_17 = arith.constant 0 : index
    %c0_18 = arith.constant 0 : index
    %41 = vector.load %arg8[%c0_17, %c0_18] : memref<128x256xbf16, #tpu.memory_space<vmem>>, vector<128x256xbf16>
    %cst_19 = arith.constant dense<0.000000e+00> : vector<256x256xf32>
    %42 = tpu.matmul %40, %41, %cst_19 {dimension_numbers = #tpu.dot_dimension_numbers<[1], [0], [0], [1], [0, 0, 1, 1], [], []>} : vector<256x128xbf16>, vector<128x256xbf16>, vector<256x256xf32> -> vector<256x256xf32>
    %c0_20 = arith.constant 0 : index
    %c0_21 = arith.constant 0 : index
    %43 = vector.load %arg9[%c0_20, %c0_21] : memref<1x256xf32, #tpu.memory_space<vmem>>, vector<1x256xf32>
    %44 = vector.broadcast %43 : vector<1x256xf32> to vector<256x256xf32>
    %45 = arith.addf %42, %44 : vector<256x256xf32>
    %cst_22 = arith.constant 0.000000e+00 : f32
    %46 = vector.broadcast %cst_22 : f32 to vector<256x256xf32>
    %47 = arith.maximumf %45, %46 : vector<256x256xf32>
    %48 = arith.truncf %47 : vector<256x256xf32> to vector<256x256xbf16>
    %49 = arith.extf %48 : vector<256x256xbf16> to vector<256x256xf32>
    %c0_23 = arith.constant 0 : index
    %c0_24 = arith.constant 0 : index
    %50 = vector.load %arg10[%c0_23, %c0_24] : memref<3x256xf32, #tpu.memory_space<vmem>>, vector<3x256xf32>
    %51 = vector.extract_strided_slice %50 {offsets = [0, 0], sizes = [1, 256], strides = [1, 1]} : vector<3x256xf32> to vector<1x256xf32>
    %52 = vector.broadcast %51 : vector<1x256xf32> to vector<256x256xf32>
    %53 = arith.mulf %49, %52 : vector<256x256xf32>
    %cst_25 = arith.constant dense<0.000000e+00> : vector<256xf32>
    %54 = vector.multi_reduction <add>, %53, %cst_25 [1] : vector<256x256xf32> to vector<256xf32>
    %55 = vector.shape_cast %54 : vector<256xf32> to vector<256x1xf32>
    %56 = vector.extract_strided_slice %50 {offsets = [1, 0], sizes = [1, 256], strides = [1, 1]} : vector<3x256xf32> to vector<1x256xf32>
    %57 = vector.broadcast %56 : vector<1x256xf32> to vector<256x256xf32>
    %58 = arith.mulf %49, %57 : vector<256x256xf32>
    %cst_26 = arith.constant dense<0.000000e+00> : vector<256xf32>
    %59 = vector.multi_reduction <add>, %58, %cst_26 [1] : vector<256x256xf32> to vector<256xf32>
    %60 = vector.shape_cast %59 : vector<256xf32> to vector<256x1xf32>
    %61 = vector.extract_strided_slice %50 {offsets = [2, 0], sizes = [1, 256], strides = [1, 1]} : vector<3x256xf32> to vector<1x256xf32>
    %62 = vector.broadcast %61 : vector<1x256xf32> to vector<256x256xf32>
    %63 = arith.mulf %49, %62 : vector<256x256xf32>
    %cst_27 = arith.constant dense<0.000000e+00> : vector<256xf32>
    %64 = vector.multi_reduction <add>, %63, %cst_27 [1] : vector<256x256xf32> to vector<256xf32>
    %65 = vector.shape_cast %64 : vector<256xf32> to vector<256x1xf32>
    %66 = tpu.concatenate %55, %60, %65 in 1 : vector<256x1xf32>, vector<256x1xf32>, vector<256x1xf32> -> vector<256x3xf32>
    %c0_28 = arith.constant 0 : index
    %c0_29 = arith.constant 0 : index
    %67 = vector.load %arg11[%c0_28, %c0_29] : memref<1x3xf32, #tpu.memory_space<vmem>>, vector<1x3xf32>
    %68 = vector.broadcast %67 : vector<1x3xf32> to vector<256x3xf32>
    %69 = arith.addf %66, %68 : vector<256x3xf32>
    %c0_30 = arith.constant 0 : index
    %c0_31 = arith.constant 0 : index
    %70 = vector.load %arg12[%c0_30, %c0_31] : memref<256x3xf32, #tpu.memory_space<vmem>>, vector<256x3xf32>
    tpu.vector_store %arg12[%c0_30, %c0_31], %69 {strides = array<i32>} : memref<256x3xf32, #tpu.memory_space<vmem>>, vector<256x3xf32>,
    return
  }
  func.func @transform_0(%arg0: i32) -> (i32, i32) {
    %c0_i32 = arith.constant 0 : i32
    %c0_i32_0 = arith.constant 0 : i32
    return %arg0, %c0_i32 : i32, i32
  }
  func.func @transform_1(%arg0: i32) -> (i32, i32) {
    %c0_i32 = arith.constant 0 : i32
    %c0_i32_0 = arith.constant 0 : i32
    %c0_i32_1 = arith.constant 0 : i32
    return %c0_i32, %c0_i32_0 : i32, i32
  }
  func.func @transform_2(%arg0: i32) -> (i32, i32) {
    %c0_i32 = arith.constant 0 : i32
    %c0_i32_0 = arith.constant 0 : i32
    %c0_i32_1 = arith.constant 0 : i32
    return %c0_i32, %c0_i32_0 : i32, i32
  }
  func.func @transform_3(%arg0: i32) -> (i32, i32) {
    %c0_i32 = arith.constant 0 : i32
    %c0_i32_0 = arith.constant 0 : i32
    %c0_i32_1 = arith.constant 0 : i32
    return %c0_i32, %c0_i32_0 : i32, i32
  }
  func.func @transform_4(%arg0: i32) -> (i32, i32) {
    %c0_i32 = arith.constant 0 : i32
    %c0_i32_0 = arith.constant 0 : i32
    %c0_i32_1 = arith.constant 0 : i32
    return %c0_i32, %c0_i32_0 : i32, i32
  }
  func.func @transform_5(%arg0: i32) -> (i32, i32) {
    %c0_i32 = arith.constant 0 : i32
    %c0_i32_0 = arith.constant 0 : i32
    %c0_i32_1 = arith.constant 0 : i32
    return %c0_i32, %c0_i32_0 : i32, i32
  }
  func.func @transform_6(%arg0: i32) -> (i32, i32) {
    %c0_i32 = arith.constant 0 : i32
    %c0_i32_0 = arith.constant 0 : i32
    %c0_i32_1 = arith.constant 0 : i32
    return %c0_i32, %c0_i32_0 : i32, i32
  }
  func.func @transform_7(%arg0: i32) -> (i32, i32) {
    %c0_i32 = arith.constant 0 : i32
    %c0_i32_0 = arith.constant 0 : i32
    %c0_i32_1 = arith.constant 0 : i32
    return %c0_i32, %c0_i32_0 : i32, i32
  }
  func.func @transform_8(%arg0: i32) -> (i32, i32) {
    %c0_i32 = arith.constant 0 : i32
    %c0_i32_0 = arith.constant 0 : i32
    %c0_i32_1 = arith.constant 0 : i32
    return %c0_i32, %c0_i32_0 : i32, i32
  }
  func.func @transform_9(%arg0: i32) -> (i32, i32) {
    %c0_i32 = arith.constant 0 : i32
    %c0_i32_0 = arith.constant 0 : i32
    %c0_i32_1 = arith.constant 0 : i32
    return %c0_i32, %c0_i32_0 : i32, i32
  }
  func.func @transform_10(%arg0: i32) -> (i32, i32) {
    %c0_i32 = arith.constant 0 : i32
    %c0_i32_0 = arith.constant 0 : i32
    %c0_i32_1 = arith.constant 0 : i32
    return %c0_i32, %c0_i32_0 : i32, i32
  }
  func.func @transform_11(%arg0: i32) -> (i32, i32) {
    %c0_i32 = arith.constant 0 : i32
    %c0_i32_0 = arith.constant 0 : i32
    return %arg0, %c0_i32 : i32, i32
  }
}

</mosaic_0001>

<llo_original>
// kernel: tpu_custom_call.1
$region0: #{tpu_custom_call.1}
  #allocation0 [shape = 'u32[]', space=smem, size = 0x4, offset = 0x4, fixed_abs, tag = 'smem constant byte address 0x4 - core index']
  #allocation1 [shape = 'u32[72,128]{1,0:T(1,128)}', space=vmem, size = 0x9000, scoped, tag = 'internal scratch']
  %s0 = inlined_call_operand.vmem [shape: f32[256,3], index: 0, kind: input, shape index: {}]
  %s1 = inlined_call_operand.vmem [shape: f32[3,256], index: 1, kind: input, shape index: {}]
  %s2 = inlined_call_operand.hbm [shape: f32[1,256], index: 2, kind: input, shape index: {}]
  %s3 = inlined_call_operand.vmem [shape: bf16[256,128], index: 3, kind: input, shape index: {}]
  %s4 = inlined_call_operand.hbm [shape: f32[1,128], index: 4, kind: input, shape index: {}]
  %s5 = inlined_call_operand.hbm [shape: bf16[128,128], index: 5, kind: input, shape index: {}]
  %s6 = inlined_call_operand.hbm [shape: f32[1,128], index: 6, kind: input, shape index: {}]
  %s7 = inlined_call_operand.vmem [shape: bf16[128,256], index: 7, kind: input, shape index: {}]
  %s8 = inlined_call_operand.hbm [shape: f32[1,256], index: 8, kind: input, shape index: {}]
  %s9 = inlined_call_operand.vmem [shape: f32[3,256], index: 9, kind: input, shape index: {}]
  %s10 = inlined_call_operand.hbm [shape: f32[1,3], index: 10, kind: input, shape index: {}]
  %s11 = inlined_call_operand.vmem [shape: f32[256,3], index: 11, kind: output, shape index: {}]
  %s12 = sld [smem:[#allocation0]]
  $region78: #{tpu_custom_call.1} parent=0
    _
  %s14 = ssub.s32 1, %s12
  %s15 = scalar_select 0, %s14, %s12
  $region1: #{tpu_custom_call.1} parent=0
    #allocation2 [shape = 'u8[1024]{0}', space=vmem, size = 0x400, scoped, tag = 'input window, operand 2, single buffered']
    #allocation3 [shape = 's32[1]{0}', space=sflag, size = 0x4, scoped, tag = 'scoped memory for tpu_custom_call.1']
    #allocation4 [shape = 'u8[512]{0}', space=vmem, size = 0x400, scoped, tag = 'input window, operand 4, single buffered']
    #allocation5 [shape = 's32[1]{0}', space=sflag, size = 0x4, scoped, tag = 'scoped memory for tpu_custom_call.1']
    #allocation6 [shape = 'u8[32768]{0}', space=vmem, size = 0x8000, scoped, tag = 'input window, operand 5, single buffered']
    #allocation7 [shape = 'u8[512]{0}', space=vmem, size = 0x400, scoped, tag = 'input window, operand 6, single buffered']
    #allocation8 [shape = 's32[1]{0}', space=sflag, size = 0x4, scoped, tag = 'scoped memory for tpu_custom_call.1']
    #allocation9 [shape = 'u8[1024]{0}', space=vmem, size = 0x400, scoped, tag = 'input window, operand 8, single buffered']
    #allocation10 [shape = 'u8[512]{0}', space=vmem, size = 0x400, scoped, tag = 'input window, operand 10, single buffered']
    #allocation11 [shape = 's32[1]{0}', space=sflag, size = 0x4, scoped, tag = 'scoped memory for tpu_custom_call.1']
    %16 = vsyncpa [#allocation3], 0
    %17 = vsyncpa [#allocation5], 0
    %18 = vsyncpa [#allocation8], 0
    %19 = vsyncpa [#allocation11], 0
    // Predicated region
    $region2: #{tpu_custom_call.1} parent=1 // pred_check
      _
    $region3: #{tpu_custom_call.1} parent=1 // pred_check_branch
      %21 = sbr.rel (0) target = $region5
    $region4: #{tpu_custom_call.1} parent=1 // pred_region
      _
    $region5: #{tpu_custom_call.1} parent=1 // pred_fallthru
      _
    // Predicated region
    $region6: #{tpu_custom_call.1} parent=1 // pred_check
      _
    $region7: #{tpu_custom_call.1} parent=1 // pred_check_branch
      %23 = sbr.rel (0) target = $region9
    $region8: #{tpu_custom_call.1} parent=1 // pred_region
      _
    $region9: #{tpu_custom_call.1} parent=1 // pred_fallthru
      _
    // Predicated region
    $region10: #{tpu_custom_call.1} parent=1 // pred_check
      _
    $region11: #{tpu_custom_call.1} parent=1 // pred_check_branch
      %25 = sbr.rel (0) target = $region13
    $region12: #{tpu_custom_call.1} parent=1 // pred_region
      %27 = vsyncadd [#allocation3], 0
      %s29 = sshll.u32 %s2, 4
      %s30 = int_to_ptr.hbm [resolvable:$true] %s29
      %s31 = sshll.u32 [#allocation2], 4
      %s32 = int_to_ptr.vmem [resolvable:$true] %s31
      %34 = dma.hbm_to_vmem [thread:$0]  %s30, 32, %s32, [#allocation3]
    $region13: #{tpu_custom_call.1} parent=1 // pred_fallthru
      _
    // Predicated region
    $region14: #{tpu_custom_call.1} parent=1 // pred_check
      _
    $region15: #{tpu_custom_call.1} parent=1 // pred_check_branch
      %36 = sbr.rel (0) target = $region17
    $region16: #{tpu_custom_call.1} parent=1 // pred_region
      _
    $region17: #{tpu_custom_call.1} parent=1 // pred_fallthru
      _
    // Predicated region
    $region18: #{tpu_custom_call.1} parent=1 // pred_check
      _
    $region19: #{tpu_custom_call.1} parent=1 // pred_check_branch
      %38 = sbr.rel (0) target = $region21
    $region20: #{tpu_custom_call.1} parent=1 // pred_region
      %40 = vsyncadd [#allocation5], 0
      %s42 = sshll.u32 %s4, 4
      %s43 = int_to_ptr.hbm [resolvable:$true] %s42
      %s44 = sshll.u32 [#allocation4], 4
      %s45 = int_to_ptr.vmem [resolvable:$true] %s44
      %47 = dma.hbm_to_vmem [thread:$0]  %s43, 16, %s45, [#allocation5]
    $region21: #{tpu_custom_call.1} parent=1 // pred_fallthru
      _
    // Predicated region
    $region22: #{tpu_custom_call.1} parent=1 // pred_check
      _
    $region23: #{tpu_custom_call.1} parent=1 // pred_check_branch
      %49 = sbr.rel (0) target = $region25
    $region24: #{tpu_custom_call.1} parent=1 // pred_region
      %51 = vsyncadd [#allocation5], 0
      %s52 = sshll.u32 %s5, 4
      %s53 = int_to_ptr.hbm [resolvable:$true] %s52
      %s54 = sshll.u32 [#allocation6], 4
      %s55 = int_to_ptr.vmem [resolvable:$true] %s54
      %60 = dma.hbm_to_vmem [thread:$0]  %s53, 1024, %s55, [#allocation5], 64, 64, 4
    $region25: #{tpu_custom_call.1} parent=1 // pred_fallthru
      _
    // Predicated region
    $region26: #{tpu_custom_call.1} parent=1 // pred_check
      _
    $region27: #{tpu_custom_call.1} parent=1 // pred_check_branch
      %62 = sbr.rel (0) target = $region29
    $region28: #{tpu_custom_call.1} parent=1 // pred_region
      %64 = vsyncadd [#allocation8], 0
      %s66 = sshll.u32 %s6, 4
      %s67 = int_to_ptr.hbm [resolvable:$true] %s66
      %s68 = sshll.u32 [#allocation7], 4
      %s69 = int_to_ptr.vmem [resolvable:$true] %s68
      %71 = dma.hbm_to_vmem [thread:$0]  %s67, 16, %s69, [#allocation8]
    $region29: #{tpu_custom_call.1} parent=1 // pred_fallthru
      _
    // Predicated region
    $region30: #{tpu_custom_call.1} parent=1 // pred_check
      _
    $region31: #{tpu_custom_call.1} parent=1 // pred_check_branch
      %73 = sbr.rel (0) target = $region33
    $region32: #{tpu_custom_call.1} parent=1 // pred_region
      _
    $region33: #{tpu_custom_call.1} parent=1 // pred_fallthru
      _
    // Predicated region
    $region34: #{tpu_custom_call.1} parent=1 // pred_check
      _
    $region35: #{tpu_custom_call.1} parent=1 // pred_check_branch
      %75 = sbr.rel (0) target = $region37
    $region36: #{tpu_custom_call.1} parent=1 // pred_region
      %77 = vsyncadd [#allocation8], 0
      %s79 = sshll.u32 %s8, 4
      %s80 = int_to_ptr.hbm [resolvable:$true] %s79
      %s81 = sshll.u32 [#allocation9], 4
      %s82 = int_to_ptr.vmem [resolvable:$true] %s81
      %84 = dma.hbm_to_vmem [thread:$0]  %s80, 32, %s82, [#allocation8]
    $region37: #{tpu_custom_call.1} parent=1 // pred_fallthru
      _
    // Predicated region
    $region38: #{tpu_custom_call.1} parent=1 // pred_check
      _
    $region39: #{tpu_custom_call.1} parent=1 // pred_check_branch
      %86 = sbr.rel (0) target = $region41
    $region40: #{tpu_custom_call.1} parent=1 // pred_region
      _
    $region41: #{tpu_custom_call.1} parent=1 // pred_fallthru
      _
    // Predicated region
    $region42: #{tpu_custom_call.1} parent=1 // pred_check
      _
    $region43: #{tpu_custom_call.1} parent=1 // pred_check_branch
      %88 = sbr.rel (0) target = $region45
    $region44: #{tpu_custom_call.1} parent=1 // pred_region
      %90 = vsyncadd [#allocation11], 0
      %s92 = sshll.u32 %s10, 4
      %s93 = int_to_ptr.hbm [resolvable:$true] %s92
      %s94 = sshll.u32 [#allocation10], 4
      %s95 = int_to_ptr.vmem [resolvable:$true] %s94
      %97 = dma.hbm_to_vmem [thread:$0]  %s93, 16, %s95, [#allocation11]
    $region45: #{tpu_custom_call.1} parent=1 // pred_fallthru
      _
    // Predicated region
    $region46: #{tpu_custom_call.1} parent=1 // pred_check
      _
    $region47: #{tpu_custom_call.1} parent=1 // pred_check_branch
      %99 = sbr.rel (0) target = $region49
    $region48: #{tpu_custom_call.1} parent=1 // pred_region
      %101 = dma.done [#allocation3], 32
    $region49: #{tpu_custom_call.1} parent=1 // pred_fallthru
      _
    // Predicated region
    $region50: #{tpu_custom_call.1} parent=1 // pred_check
      _
    $region51: #{tpu_custom_call.1} parent=1 // pred_check_branch
      %103 = sbr.rel (0) target = $region53
    $region52: #{tpu_custom_call.1} parent=1 // pred_region
      %105 = dma.done [#allocation5], 16
    $region53: #{tpu_custom_call.1} parent=1 // pred_fallthru
      _
    // Predicated region
    $region54: #{tpu_custom_call.1} parent=1 // pred_check
      _
    $region55: #{tpu_custom_call.1} parent=1 // pred_check_branch
      %107 = sbr.rel (0) target = $region57
    $region56: #{tpu_custom_call.1} parent=1 // pred_region
      %109 = dma.done [#allocation5], 1024
    $region57: #{tpu_custom_call.1} parent=1 // pred_fallthru
      _
    // Predicated region
    $region58: #{tpu_custom_call.1} parent=1 // pred_check
      _
    $region59: #{tpu_custom_call.1} parent=1 // pred_check_branch
      %111 = sbr.rel (0) target = $region61
    $region60: #{tpu_custom_call.1} parent=1 // pred_region
      %113 = dma.done [#allocation8], 16
    $region61: #{tpu_custom_call.1} parent=1 // pred_fallthru
      _
    // Predicated region
    $region62: #{tpu_custom_call.1} parent=1 // pred_check
      _
    $region63: #{tpu_custom_call.1} parent=1 // pred_check_branch
      %115 = sbr.rel (0) target = $region65
    $region64: #{tpu_custom_call.1} parent=1 // pred_region
      %117 = dma.done [#allocation8], 32
    $region65: #{tpu_custom_call.1} parent=1 // pred_fallthru
      _
    // Predicated region
    $region66: #{tpu_custom_call.1} parent=1 // pred_check
      _
    $region67: #{tpu_custom_call.1} parent=1 // pred_check_branch
      %119 = sbr.rel (0) target = $region69
    $region68: #{tpu_custom_call.1} parent=1 // pred_region
      %121 = dma.done [#allocation11], 16
    $region69: #{tpu_custom_call.1} parent=1 // pred_fallthru
      _
    %v122 = vld [vmem:[%s0] sm:$0xff]
    %v123 = vld [vmem:[%s0 + $0x8] sm:$0xff]
    %v124 = vld [vmem:[%s0 + $0x10] sm:$0xff]
    %v125 = vld [vmem:[%s0 + $0x18] sm:$0xff]
    %v126 = vld [vmem:[%s0 + $0x20] sm:$0xff]
    %v127 = vld [vmem:[%s0 + $0x28] sm:$0xff]
    %v128 = vld [vmem:[%s0 + $0x30] sm:$0xff]
    %v129 = vld [vmem:[%s0 + $0x38] sm:$0xff]
    %v130 = vld [vmem:[%s0 + $0x40] sm:$0xff]
    %v131 = vld [vmem:[%s0 + $0x48] sm:$0xff]
    %v132 = vld [vmem:[%s0 + $0x50] sm:$0xff]
    %v133 = vld [vmem:[%s0 + $0x58] sm:$0xff]
    %v134 = vld [vmem:[%s0 + $0x60] sm:$0xff]
    %v135 = vld [vmem:[%s0 + $0x68] sm:$0xff]
    %v136 = vld [vmem:[%s0 + $0x70] sm:$0xff]
    %v137 = vld [vmem:[%s0 + $0x78] sm:$0xff]
    %v138 = vld [vmem:[%s0 + $0x80] sm:$0xff]
    %v139 = vld [vmem:[%s0 + $0x88] sm:$0xff]
    %v140 = vld [vmem:[%s0 + $0x90] sm:$0xff]
    %v141 = vld [vmem:[%s0 + $0x98] sm:$0xff]
    %v142 = vld [vmem:[%s0 + $0xa0] sm:$0xff]
    %v143 = vld [vmem:[%s0 + $0xa8] sm:$0xff]
    %v144 = vld [vmem:[%s0 + $0xb0] sm:$0xff]
    %v145 = vld [vmem:[%s0 + $0xb8] sm:$0xff]
    %v146 = vld [vmem:[%s0 + $0xc0] sm:$0xff]
    %v147 = vld [vmem:[%s0 + $0xc8] sm:$0xff]
    %v148 = vld [vmem:[%s0 + $0xd0] sm:$0xff]
    %v149 = vld [vmem:[%s0 + $0xd8] sm:$0xff]
    %v150 = vld [vmem:[%s0 + $0xe0] sm:$0xff]
    %v151 = vld [vmem:[%s0 + $0xe8] sm:$0xff]
    %v152 = vld [vmem:[%s0 + $0xf0] sm:$0xff]
    %v153 = vld [vmem:[%s0 + $0xf8] sm:$0xff]
    %v154 = vld [vmem:[%s1] sm:$0x77]
    %156 = vset.pattern.permute.xlu0 0
    %157 = vperm.xlu0 %156, %v122
    %v158 = vpop.permute.xlu0 %157
    %161 = vset.pattern.permute.xlu0 0
    %162 = vperm.xlu0 %161, %v123
    %v163 = vpop.permute.xlu0 %162
    %166 = vset.pattern.permute.xlu0 0
    %167 = vperm.xlu0 %166, %v124
    %v168 = vpop.permute.xlu0 %167
    %171 = vset.pattern.permute.xlu0 0
    %172 = vperm.xlu0 %171, %v125
    %v173 = vpop.permute.xlu0 %172
    %176 = vset.pattern.permute.xlu0 0
    %177 = vperm.xlu0 %176, %v126
    %v178 = vpop.permute.xlu0 %177
    %181 = vset.pattern.permute.xlu0 0
    %182 = vperm.xlu0 %181, %v127
    %v183 = vpop.permute.xlu0 %182
    %186 = vset.pattern.permute.xlu0 0
    %187 = vperm.xlu0 %186, %v128
    %v188 = vpop.permute.xlu0 %187
    %191 = vset.pattern.permute.xlu0 0
    %192 = vperm.xlu0 %191, %v129
    %v193 = vpop.permute.xlu0 %192
    %196 = vset.pattern.permute.xlu0 0
    %197 = vperm.xlu0 %196, %v130
    %v198 = vpop.permute.xlu0 %197
    %201 = vset.pattern.permute.xlu0 0
    %202 = vperm.xlu0 %201, %v131
    %v203 = vpop.permute.xlu0 %202
    %206 = vset.pattern.permute.xlu0 0
    %207 = vperm.xlu0 %206, %v132
    %v208 = vpop.permute.xlu0 %207
    %211 = vset.pattern.permute.xlu0 0
    %212 = vperm.xlu0 %211, %v133
    %v213 = vpop.permute.xlu0 %212
    %216 = vset.pattern.permute.xlu0 0
    %217 = vperm.xlu0 %216, %v134
    %v218 = vpop.permute.xlu0 %217
    %221 = vset.pattern.permute.xlu0 0
    %222 = vperm.xlu0 %221, %v135
    %v223 = vpop.permute.xlu0 %222
    %226 = vset.pattern.permute.xlu0 0
    %227 = vperm.xlu0 %226, %v136
    %v228 = vpop.permute.xlu0 %227
    %231 = vset.pattern.permute.xlu0 0
    %232 = vperm.xlu0 %231, %v137
    %v233 = vpop.permute.xlu0 %232
    %236 = vset.pattern.permute.xlu0 0
    %237 = vperm.xlu0 %236, %v138
    %v238 = vpop.permute.xlu0 %237
    %241 = vset.pattern.permute.xlu0 0
    %242 = vperm.xlu0 %241, %v139
    %v243 = vpop.permute.xlu0 %242
    %246 = vset.pattern.permute.xlu0 0
    %247 = vperm.xlu0 %246, %v140
    %v248 = vpop.permute.xlu0 %247
    %251 = vset.pattern.permute.xlu0 0
    %252 = vperm.xlu0 %251, %v141
    %v253 = vpop.permute.xlu0 %252
    %256 = vset.pattern.permute.xlu0 0
    %257 = vperm.xlu0 %256, %v142
    %v258 = vpop.permute.xlu0 %257
    %261 = vset.pattern.permute.xlu0 0
    %262 = vperm.xlu0 %261, %v143
    %v263 = vpop.permute.xlu0 %262
    %266 = vset.pattern.permute.xlu0 0
    %267 = vperm.xlu0 %266, %v144
    %v268 = vpop.permute.xlu0 %267
    %271 = vset.pattern.permute.xlu0 0
    %272 = vperm.xlu0 %271, %v145
    %v273 = vpop.permute.xlu0 %272
    %276 = vset.pattern.permute.xlu0 0
    %277 = vperm.xlu0 %276, %v146
    %v278 = vpop.permute.xlu0 %277
    %281 = vset.pattern.permute.xlu0 0
    %282 = vperm.xlu0 %281, %v147
    %v283 = vpop.permute.xlu0 %282
    %286 = vset.pattern.permute.xlu0 0
    %287 = vperm.xlu0 %286, %v148
    %v288 = vpop.permute.xlu0 %287
    %291 = vset.pattern.permute.xlu0 0
    %292 = vperm.xlu0 %291, %v149
    %v293 = vpop.permute.xlu0 %292
    %296 = vset.pattern.permute.xlu0 0
    %297 = vperm.xlu0 %296, %v150
    %v298 = vpop.permute.xlu0 %297
    %301 = vset.pattern.permute.xlu0 0
    %302 = vperm.xlu0 %301, %v151
    %v303 = vpop.permute.xlu0 %302
    %306 = vset.pattern.permute.xlu0 0
    %307 = vperm.xlu0 %306, %v152
    %v308 = vpop.permute.xlu0 %307
    %311 = vset.pattern.permute.xlu0 0
    %312 = vperm.xlu0 %311, %v153
    %v313 = vpop.permute.xlu0 %312
    %v316 = vperm.slane %v154, 0
    %v317 = vperm.slane %v154, 4
    %v320 = vperm.slane %v316, 0
    %v321 = vperm.slane %v317, 0
    %v322 = vmul.f32 %v158, %v320
    %v323 = vmul.f32 %v158, %v321
    %v324 = vmul.f32 %v163, %v320
    %v325 = vmul.f32 %v163, %v321
    %v326 = vmul.f32 %v168, %v320
    %v327 = vmul.f32 %v168, %v321
    %v328 = vmul.f32 %v173, %v320
    %v329 = vmul.f32 %v173, %v321
    %v330 = vmul.f32 %v178, %v320
    %v331 = vmul.f32 %v178, %v321
    %v332 = vmul.f32 %v183, %v320
    %v333 = vmul.f32 %v183, %v321
    %v334 = vmul.f32 %v188, %v320
    %v335 = vmul.f32 %v188, %v321
    %v336 = vmul.f32 %v193, %v320
    %v337 = vmul.f32 %v193, %v321
    %v338 = vmul.f32 %v198, %v320
    %v339 = vmul.f32 %v198, %v321
    %v340 = vmul.f32 %v203, %v320
    %v341 = vmul.f32 %v203, %v321
    %v342 = vmul.f32 %v208, %v320
    %v343 = vmul.f32 %v208, %v321
    %v344 = vmul.f32 %v213, %v320
    %v345 = vmul.f32 %v213, %v321
    %v346 = vmul.f32 %v218, %v320
    %v347 = vmul.f32 %v218, %v321
    %v348 = vmul.f32 %v223, %v320
    %v349 = vmul.f32 %v223, %v321
    %v350 = vmul.f32 %v228, %v320
    %v351 = vmul.f32 %v228, %v321
    %v352 = vmul.f32 %v233, %v320
    %v353 = vmul.f32 %v233, %v321
    %v354 = vmul.f32 %v238, %v320
    %v355 = vmul.f32 %v238, %v321
    %v356 = vmul.f32 %v243, %v320
    %v357 = vmul.f32 %v243, %v321
    %v358 = vmul.f32 %v248, %v320
    %v359 = vmul.f32 %v248, %v321
    %v360 = vmul.f32 %v253, %v320
    %v361 = vmul.f32 %v253, %v321
    %v362 = vmul.f32 %v258, %v320
    %v363 = vmul.f32 %v258, %v321
    %v364 = vmul.f32 %v263, %v320
    %v365 = vmul.f32 %v263, %v321
    %v366 = vmul.f32 %v268, %v320
    %v367 = vmul.f32 %v268, %v321
    %v368 = vmul.f32 %v273, %v320
    %v369 = vmul.f32 %v273, %v321
    %v370 = vmul.f32 %v278, %v320
    %v371 = vmul.f32 %v278, %v321
    %v372 = vmul.f32 %v283, %v320
    %v373 = vmul.f32 %v283, %v321
    %v374 = vmul.f32 %v288, %v320
    %v375 = vmul.f32 %v288, %v321
    %v376 = vmul.f32 %v293, %v320
    %v377 = vmul.f32 %v293, %v321
    %v378 = vmul.f32 %v298, %v320
    %v379 = vmul.f32 %v298, %v321
    %v380 = vmul.f32 %v303, %v320
    %v381 = vmul.f32 %v303, %v321
    %v382 = vmul.f32 %v308, %v320
    %v383 = vmul.f32 %v308, %v321
    %v384 = vmul.f32 %v313, %v320
    %v385 = vmul.f32 %v313, %v321
    %386 = vset.pattern.permute.xlu0 1
    %387 = vperm.xlu0 %386, %v122
    %v388 = vpop.permute.xlu0 %387
    %390 = vset.pattern.permute.xlu0 1
    %391 = vperm.xlu0 %390, %v123
    %v392 = vpop.permute.xlu0 %391
    %394 = vset.pattern.permute.xlu0 1
    %395 = vperm.xlu0 %394, %v124
    %v396 = vpop.permute.xlu0 %395
    %398 = vset.pattern.permute.xlu0 1
    %399 = vperm.xlu0 %398, %v125
    %v400 = vpop.permute.xlu0 %399
    %402 = vset.pattern.permute.xlu0 1
    %403 = vperm.xlu0 %402, %v126
    %v404 = vpop.permute.xlu0 %403
    %406 = vset.pattern.permute.xlu0 1
    %407 = vperm.xlu0 %406, %v127
    %v408 = vpop.permute.xlu0 %407
    %410 = vset.pattern.permute.xlu0 1
    %411 = vperm.xlu0 %410, %v128
    %v412 = vpop.permute.xlu0 %411
    %414 = vset.pattern.permute.xlu0 1
    %415 = vperm.xlu0 %414, %v129
    %v416 = vpop.permute.xlu0 %415
    %418 = vset.pattern.permute.xlu0 1
    %419 = vperm.xlu0 %418, %v130
    %v420 = vpop.permute.xlu0 %419
    %422 = vset.pattern.permute.xlu0 1
    %423 = vperm.xlu0 %422, %v131
    %v424 = vpop.permute.xlu0 %423
    %426 = vset.pattern.permute.xlu0 1
    %427 = vperm.xlu0 %426, %v132
    %v428 = vpop.permute.xlu0 %427
    %430 = vset.pattern.permute.xlu0 1
    %431 = vperm.xlu0 %430, %v133
    %v432 = vpop.permute.xlu0 %431
    %434 = vset.pattern.permute.xlu0 1
    %435 = vperm.xlu0 %434, %v134
    %v436 = vpop.permute.xlu0 %435
    %438 = vset.pattern.permute.xlu0 1
    %439 = vperm.xlu0 %438, %v135
    %v440 = vpop.permute.xlu0 %439
    %442 = vset.pattern.permute.xlu0 1
    %443 = vperm.xlu0 %442, %v136
    %v444 = vpop.permute.xlu0 %443
    %446 = vset.pattern.permute.xlu0 1
    %447 = vperm.xlu0 %446, %v137
    %v448 = vpop.permute.xlu0 %447
    %450 = vset.pattern.permute.xlu0 1
    %451 = vperm.xlu0 %450, %v138
    %v452 = vpop.permute.xlu0 %451
    %454 = vset.pattern.permute.xlu0 1
    %455 = vperm.xlu0 %454, %v139
    %v456 = vpop.permute.xlu0 %455
    %458 = vset.pattern.permute.xlu0 1
    %459 = vperm.xlu0 %458, %v140
    %v460 = vpop.permute.xlu0 %459
    %462 = vset.pattern.permute.xlu0 1
    %463 = vperm.xlu0 %462, %v141
    %v464 = vpop.permute.xlu0 %463
    %466 = vset.pattern.permute.xlu0 1
    %467 = vperm.xlu0 %466, %v142
    %v468 = vpop.permute.xlu0 %467
    %470 = vset.pattern.permute.xlu0 1
    %471 = vperm.xlu0 %470, %v143
    %v472 = vpop.permute.xlu0 %471
    %474 = vset.pattern.permute.xlu0 1
    %475 = vperm.xlu0 %474, %v144
    %v476 = vpop.permute.xlu0 %475
    %478 = vset.pattern.permute.xlu0 1
    %479 = vperm.xlu0 %478, %v145
    %v480 = vpop.permute.xlu0 %479
    %482 = vset.pattern.permute.xlu0 1
    %483 = vperm.xlu0 %482, %v146
    %v484 = vpop.permute.xlu0 %483
    %486 = vset.pattern.permute.xlu0 1
    %487 = vperm.xlu0 %486, %v147
    %v488 = vpop.permute.xlu0 %487
    %490 = vset.pattern.permute.xlu0 1
    %491 = vperm.xlu0 %490, %v148
    %v492 = vpop.permute.xlu0 %491
    %494 = vset.pattern.permute.xlu0 1
    %495 = vperm.xlu0 %494, %v149
    %v496 = vpop.permute.xlu0 %495
    %498 = vset.pattern.permute.xlu0 1
    %499 = vperm.xlu0 %498, %v150
    %v500 = vpop.permute.xlu0 %499
    %502 = vset.pattern.permute.xlu0 1
    %503 = vperm.xlu0 %502, %v151
    %v504 = vpop.permute.xlu0 %503
    %506 = vset.pattern.permute.xlu0 1
    %507 = vperm.xlu0 %506, %v152
    %v508 = vpop.permute.xlu0 %507
    %510 = vset.pattern.permute.xlu0 1
    %511 = vperm.xlu0 %510, %v153
    %v512 = vpop.permute.xlu0 %511
    %v514 = vperm.slane %v154, 1
    %v515 = vperm.slane %v154, 5
    %v518 = vperm.slane %v514, 1
    %v519 = vperm.slane %v515, 1
    %v520 = vmul.f32 %v388, %v518
    %v521 = vmul.f32 %v388, %v519
    %v522 = vmul.f32 %v392, %v518
    %v523 = vmul.f32 %v392, %v519
    %v524 = vmul.f32 %v396, %v518
    %v525 = vmul.f32 %v396, %v519
    %v526 = vmul.f32 %v400, %v518
    %v527 = vmul.f32 %v400, %v519
    %v528 = vmul.f32 %v404, %v518
    %v529 = vmul.f32 %v404, %v519
    %v530 = vmul.f32 %v408, %v518
    %v531 = vmul.f32 %v408, %v519
    %v532 = vmul.f32 %v412, %v518
    %v533 = vmul.f32 %v412, %v519
    %v534 = vmul.f32 %v416, %v518
    %v535 = vmul.f32 %v416, %v519
    %v536 = vmul.f32 %v420, %v518
    %v537 = vmul.f32 %v420, %v519
    %v538 = vmul.f32 %v424, %v518
    %v539 = vmul.f32 %v424, %v519
    %v540 = vmul.f32 %v428, %v518
    %v541 = vmul.f32 %v428, %v519
    %v542 = vmul.f32 %v432, %v518
    %v543 = vmul.f32 %v432, %v519
    %v544 = vmul.f32 %v436, %v518
    %v545 = vmul.f32 %v436, %v519
    %v546 = vmul.f32 %v440, %v518
    %v547 = vmul.f32 %v440, %v519
    %v548 = vmul.f32 %v444, %v518
    %v549 = vmul.f32 %v444, %v519
    %v550 = vmul.f32 %v448, %v518
    %v551 = vmul.f32 %v448, %v519
    %v552 = vmul.f32 %v452, %v518
    %v553 = vmul.f32 %v452, %v519
    %v554 = vmul.f32 %v456, %v518
    %v555 = vmul.f32 %v456, %v519
    %v556 = vmul.f32 %v460, %v518
    %v557 = vmul.f32 %v460, %v519
    %v558 = vmul.f32 %v464, %v518
    %v559 = vmul.f32 %v464, %v519
    %v560 = vmul.f32 %v468, %v518
    %v561 = vmul.f32 %v468, %v519
    %v562 = vmul.f32 %v472, %v518
    %v563 = vmul.f32 %v472, %v519
    %v564 = vmul.f32 %v476, %v518
    %v565 = vmul.f32 %v476, %v519
    %v566 = vmul.f32 %v480, %v518
    %v567 = vmul.f32 %v480, %v519
    %v568 = vmul.f32 %v484, %v518
    %v569 = vmul.f32 %v484, %v519
    %v570 = vmul.f32 %v488, %v518
    %v571 = vmul.f32 %v488, %v519
    %v572 = vmul.f32 %v492, %v518
    %v573 = vmul.f32 %v492, %v519
    %v574 = vmul.f32 %v496, %v518
    %v575 = vmul.f32 %v496, %v519
    %v576 = vmul.f32 %v500, %v518
    %v577 = vmul.f32 %v500, %v519
    %v578 = vmul.f32 %v504, %v518
    %v579 = vmul.f32 %v504, %v519
    %v580 = vmul.f32 %v508, %v518
    %v581 = vmul.f32 %v508, %v519
    %v582 = vmul.f32 %v512, %v518
    %v583 = vmul.f32 %v512, %v519
    %v584 = vadd.f32 %v322, %v520
    %v585 = vadd.f32 %v323, %v521
    %v586 = vadd.f32 %v324, %v522
    %v587 = vadd.f32 %v325, %v523
    %v588 = vadd.f32 %v326, %v524
    %v589 = vadd.f32 %v327, %v525
    %v590 = vadd.f32 %v328, %v526
    %v591 = vadd.f32 %v329, %v527
    %v592 = vadd.f32 %v330, %v528
    %v593 = vadd.f32 %v331, %v529
    %v594 = vadd.f32 %v332, %v530
    %v595 = vadd.f32 %v333, %v531
    %v596 = vadd.f32 %v334, %v532
    %v597 = vadd.f32 %v335, %v533
    %v598 = vadd.f32 %v336, %v534
    %v599 = vadd.f32 %v337, %v535
    %v600 = vadd.f32 %v338, %v536
    %v601 = vadd.f32 %v339, %v537
    %v602 = vadd.f32 %v340, %v538
    %v603 = vadd.f32 %v341, %v539
    %v604 = vadd.f32 %v342, %v540
    %v605 = vadd.f32 %v343, %v541
    %v606 = vadd.f32 %v344, %v542
    %v607 = vadd.f32 %v345, %v543
    %v608 = vadd.f32 %v346, %v544
    %v609 = vadd.f32 %v347, %v545
    %v610 = vadd.f32 %v348, %v546
    %v611 = vadd.f32 %v349, %v547
    %v612 = vadd.f32 %v350, %v548
    %v613 = vadd.f32 %v351, %v549
    %v614 = vadd.f32 %v352, %v550
    %v615 = vadd.f32 %v353, %v551
    %v616 = vadd.f32 %v354, %v552
    %v617 = vadd.f32 %v355, %v553
    %v618 = vadd.f32 %v356, %v554
    %v619 = vadd.f32 %v357, %v555
    %v620 = vadd.f32 %v358, %v556
    %v621 = vadd.f32 %v359, %v557
    %v622 = vadd.f32 %v360, %v558
    %v623 = vadd.f32 %v361, %v559
    %v624 = vadd.f32 %v362, %v560
    %v625 = vadd.f32 %v363, %v561
    %v626 = vadd.f32 %v364, %v562
    %v627 = vadd.f32 %v365, %v563
    %v628 = vadd.f32 %v366, %v564
    %v629 = vadd.f32 %v367, %v565
    %v630 = vadd.f32 %v368, %v566
    %v631 = vadd.f32 %v369, %v567
    %v632 = vadd.f32 %v370, %v568
    %v633 = vadd.f32 %v371, %v569
    %v634 = vadd.f32 %v372, %v570
    %v635 = vadd.f32 %v373, %v571
    %v636 = vadd.f32 %v374, %v572
    %v637 = vadd.f32 %v375, %v573
    %v638 = vadd.f32 %v376, %v574
    %v639 = vadd.f32 %v377, %v575
    %v640 = vadd.f32 %v378, %v576
    %v641 = vadd.f32 %v379, %v577
    %v642 = vadd.f32 %v380, %v578
    %v643 = vadd.f32 %v381, %v579
    %v644 = vadd.f32 %v382, %v580
    %v645 = vadd.f32 %v383, %v581
    %v646 = vadd.f32 %v384, %v582
    %v647 = vadd.f32 %v385, %v583
    %648 = vset.pattern.permute.xlu0 2
    %649 = vperm.xlu0 %648, %v122
    %v650 = vpop.permute.xlu0 %649
    %652 = vset.pattern.permute.xlu0 2
    %653 = vperm.xlu0 %652, %v123
    %v654 = vpop.permute.xlu0 %653
    %656 = vset.pattern.permute.xlu0 2
    %657 = vperm.xlu0 %656, %v124
    %v658 = vpop.permute.xlu0 %657
    %660 = vset.pattern.permute.xlu0 2
    %661 = vperm.xlu0 %660, %v125
    %v662 = vpop.permute.xlu0 %661
    %664 = vset.pattern.permute.xlu0 2
    %665 = vperm.xlu0 %664, %v126
    %v666 = vpop.permute.xlu0 %665
    %668 = vset.pattern.permute.xlu0 2
    %669 = vperm.xlu0 %668, %v127
    %v670 = vpop.permute.xlu0 %669
    %672 = vset.pattern.permute.xlu0 2
    %673 = vperm.xlu0 %672, %v128
    %v674 = vpop.permute.xlu0 %673
    %676 = vset.pattern.permute.xlu0 2
    %677 = vperm.xlu0 %676, %v129
    %v678 = vpop.permute.xlu0 %677
    %680 = vset.pattern.permute.xlu0 2
    %681 = vperm.xlu0 %680, %v130
    %v682 = vpop.permute.xlu0 %681
    %684 = vset.pattern.permute.xlu0 2
    %685 = vperm.xlu0 %684, %v131
    %v686 = vpop.permute.xlu0 %685
    %688 = vset.pattern.permute.xlu0 2
    %689 = vperm.xlu0 %688, %v132
    %v690 = vpop.permute.xlu0 %689
    %692 = vset.pattern.permute.xlu0 2
    %693 = vperm.xlu0 %692, %v133
    %v694 = vpop.permute.xlu0 %693
    %696 = vset.pattern.permute.xlu0 2
    %697 = vperm.xlu0 %696, %v134
    %v698 = vpop.permute.xlu0 %697
    %700 = vset.pattern.permute.xlu0 2
    %701 = vperm.xlu0 %700, %v135
    %v702 = vpop.permute.xlu0 %701
    %704 = vset.pattern.permute.xlu0 2
    %705 = vperm.xlu0 %704, %v136
    %v706 = vpop.permute.xlu0 %705
    %708 = vset.pattern.permute.xlu0 2
    %709 = vperm.xlu0 %708, %v137
    %v710 = vpop.permute.xlu0 %709
    %712 = vset.pattern.permute.xlu0 2
    %713 = vperm.xlu0 %712, %v138
    %v714 = vpop.permute.xlu0 %713
    %716 = vset.pattern.permute.xlu0 2
    %717 = vperm.xlu0 %716, %v139
    %v718 = vpop.permute.xlu0 %717
    %720 = vset.pattern.permute.xlu0 2
    %721 = vperm.xlu0 %720, %v140
    %v722 = vpop.permute.xlu0 %721
    %724 = vset.pattern.permute.xlu0 2
    %725 = vperm.xlu0 %724, %v141
    %v726 = vpop.permute.xlu0 %725
    %728 = vset.pattern.permute.xlu0 2
    %729 = vperm.xlu0 %728, %v142
    %v730 = vpop.permute.xlu0 %729
    %732 = vset.pattern.permute.xlu0 2
    %733 = vperm.xlu0 %732, %v143
    %v734 = vpop.permute.xlu0 %733
    %736 = vset.pattern.permute.xlu0 2
    %737 = vperm.xlu0 %736, %v144
    %v738 = vpop.permute.xlu0 %737
    %740 = vset.pattern.permute.xlu0 2
    %741 = vperm.xlu0 %740, %v145
    %v742 = vpop.permute.xlu0 %741
    %744 = vset.pattern.permute.xlu0 2
    %745 = vperm.xlu0 %744, %v146
    %v746 = vpop.permute.xlu0 %745
    %748 = vset.pattern.permute.xlu0 2
    %749 = vperm.xlu0 %748, %v147
    %v750 = vpop.permute.xlu0 %749
    %752 = vset.pattern.permute.xlu0 2
    %753 = vperm.xlu0 %752, %v148
    %v754 = vpop.permute.xlu0 %753
    %756 = vset.pattern.permute.xlu0 2
    %757 = vperm.xlu0 %756, %v149
    %v758 = vpop.permute.xlu0 %757
    %760 = vset.pattern.permute.xlu0 2
    %761 = vperm.xlu0 %760, %v150
    %v762 = vpop.permute.xlu0 %761
    %764 = vset.pattern.permute.xlu0 2
    %765 = vperm.xlu0 %764, %v151
    %v766 = vpop.permute.xlu0 %765
    %768 = vset.pattern.permute.xlu0 2
    %769 = vperm.xlu0 %768, %v152
    %v770 = vpop.permute.xlu0 %769
    %772 = vset.pattern.permute.xlu0 2
    %773 = vperm.xlu0 %772, %v153
    %v774 = vpop.permute.xlu0 %773
    %v776 = vperm.slane %v154, 2
    %v777 = vperm.slane %v154, 6
    %v780 = vperm.slane %v776, 2
    %v781 = vperm.slane %v777, 2
    %v782 = vmul.f32 %v650, %v780
    %v783 = vmul.f32 %v650, %v781
    %v784 = vmul.f32 %v654, %v780
    %v785 = vmul.f32 %v654, %v781
    %v786 = vmul.f32 %v658, %v780
    %v787 = vmul.f32 %v658, %v781
    %v788 = vmul.f32 %v662, %v780
    %v789 = vmul.f32 %v662, %v781
    %v790 = vmul.f32 %v666, %v780
    %v791 = vmul.f32 %v666, %v781
    %v792 = vmul.f32 %v670, %v780
    %v793 = vmul.f32 %v670, %v781
    %v794 = vmul.f32 %v674, %v780
    %v795 = vmul.f32 %v674, %v781
    %v796 = vmul.f32 %v678, %v780
    %v797 = vmul.f32 %v678, %v781
    %v798 = vmul.f32 %v682, %v780
    %v799 = vmul.f32 %v682, %v781
    %v800 = vmul.f32 %v686, %v780
    %v801 = vmul.f32 %v686, %v781
    %v802 = vmul.f32 %v690, %v780
    %v803 = vmul.f32 %v690, %v781
    %v804 = vmul.f32 %v694, %v780
    %v805 = vmul.f32 %v694, %v781
    %v806 = vmul.f32 %v698, %v780
    %v807 = vmul.f32 %v698, %v781
    %v808 = vmul.f32 %v702, %v780
    %v809 = vmul.f32 %v702, %v781
    %v810 = vmul.f32 %v706, %v780
    %v811 = vmul.f32 %v706, %v781
    %v812 = vmul.f32 %v710, %v780
    %v813 = vmul.f32 %v710, %v781
    %v814 = vmul.f32 %v714, %v780
    %v815 = vmul.f32 %v714, %v781
    %v816 = vmul.f32 %v718, %v780
    %v817 = vmul.f32 %v718, %v781
    %v818 = vmul.f32 %v722, %v780
    %v819 = vmul.f32 %v722, %v781
    %v820 = vmul.f32 %v726, %v780
    %v821 = vmul.f32 %v726, %v781
    %v822 = vmul.f32 %v730, %v780
    %v823 = vmul.f32 %v730, %v781
    %v824 = vmul.f32 %v734, %v780
    %v825 = vmul.f32 %v734, %v781
    %v826 = vmul.f32 %v738, %v780
    %v827 = vmul.f32 %v738, %v781
    %v828 = vmul.f32 %v742, %v780
    %v829 = vmul.f32 %v742, %v781
    %v830 = vmul.f32 %v746, %v780
    %v831 = vmul.f32 %v746, %v781
    %v832 = vmul.f32 %v750, %v780
    %v833 = vmul.f32 %v750, %v781
    %v834 = vmul.f32 %v754, %v780
    %v835 = vmul.f32 %v754, %v781
    %v836 = vmul.f32 %v758, %v780
    %v837 = vmul.f32 %v758, %v781
    %v838 = vmul.f32 %v762, %v780
    %v839 = vmul.f32 %v762, %v781
    %v840 = vmul.f32 %v766, %v780
    %v841 = vmul.f32 %v766, %v781
    %v842 = vmul.f32 %v770, %v780
    %v843 = vmul.f32 %v770, %v781
    %v844 = vmul.f32 %v774, %v780
    %v845 = vmul.f32 %v774, %v781
    %v846 = vadd.f32 %v584, %v782
    %v847 = vadd.f32 %v585, %v783
    %v848 = vadd.f32 %v586, %v784
    %v849 = vadd.f32 %v587, %v785
    %v850 = vadd.f32 %v588, %v786
    %v851 = vadd.f32 %v589, %v787
    %v852 = vadd.f32 %v590, %v788
    %v853 = vadd.f32 %v591, %v789
    %v854 = vadd.f32 %v592, %v790
    %v855 = vadd.f32 %v593, %v791
    %v856 = vadd.f32 %v594, %v792
    %v857 = vadd.f32 %v595, %v793
    %v858 = vadd.f32 %v596, %v794
    %v859 = vadd.f32 %v597, %v795
    %v860 = vadd.f32 %v598, %v796
    %v861 = vadd.f32 %v599, %v797
    %v862 = vadd.f32 %v600, %v798
    %v863 = vadd.f32 %v601, %v799
    %v864 = vadd.f32 %v602, %v800
    %v865 = vadd.f32 %v603, %v801
    %v866 = vadd.f32 %v604, %v802
    %v867 = vadd.f32 %v605, %v803
    %v868 = vadd.f32 %v606, %v804
    %v869 = vadd.f32 %v607, %v805
    %v870 = vadd.f32 %v608, %v806
    %v871 = vadd.f32 %v609, %v807
    %v872 = vadd.f32 %v610, %v808
    %v873 = vadd.f32 %v611, %v809
    %v874 = vadd.f32 %v612, %v810
    %v875 = vadd.f32 %v613, %v811
    %v876 = vadd.f32 %v614, %v812
    %v877 = vadd.f32 %v615, %v813
    %v878 = vadd.f32 %v616, %v814
    %v879 = vadd.f32 %v617, %v815
    %v880 = vadd.f32 %v618, %v816
    %v881 = vadd.f32 %v619, %v817
    %v882 = vadd.f32 %v620, %v818
    %v883 = vadd.f32 %v621, %v819
    %v884 = vadd.f32 %v622, %v820
    %v885 = vadd.f32 %v623, %v821
    %v886 = vadd.f32 %v624, %v822
    %v887 = vadd.f32 %v625, %v823
    %v888 = vadd.f32 %v626, %v824
    %v889 = vadd.f32 %v627, %v825
    %v890 = vadd.f32 %v628, %v826
    %v891 = vadd.f32 %v629, %v827
    %v892 = vadd.f32 %v630, %v828
    %v893 = vadd.f32 %v631, %v829
    %v894 = vadd.f32 %v632, %v830
    %v895 = vadd.f32 %v633, %v831
    %v896 = vadd.f32 %v634, %v832
    %v897 = vadd.f32 %v635, %v833
    %v898 = vadd.f32 %v636, %v834
    %v899 = vadd.f32 %v637, %v835
    %v900 = vadd.f32 %v638, %v836
    %v901 = vadd.f32 %v639, %v837
    %v902 = vadd.f32 %v640, %v838
    %v903 = vadd.f32 %v641, %v839
    %v904 = vadd.f32 %v642, %v840
    %v905 = vadd.f32 %v643, %v841
    %v906 = vadd.f32 %v644, %v842
    %v907 = vadd.f32 %v645, %v843
    %v908 = vadd.f32 %v646, %v844
    %v909 = vadd.f32 %v647, %v845
    %v910 = vld [vmem:[#allocation2] sm:$0x3]
    %v912 = vperm.slane %v910, 0
    %v913 = vperm.slane %v910, 1
    %v916 = vadd.f32 %v846, %v912
    %v917 = vadd.f32 %v847, %v913
    %v918 = vadd.f32 %v848, %v912
    %v919 = vadd.f32 %v849, %v913
    %v920 = vadd.f32 %v850, %v912
    %v921 = vadd.f32 %v851, %v913
    %v922 = vadd.f32 %v852, %v912
    %v923 = vadd.f32 %v853, %v913
    %v924 = vadd.f32 %v854, %v912
    %v925 = vadd.f32 %v855, %v913
    %v926 = vadd.f32 %v856, %v912
    %v927 = vadd.f32 %v857, %v913
    %v928 = vadd.f32 %v858, %v912
    %v929 = vadd.f32 %v859, %v913
    %v930 = vadd.f32 %v860, %v912
    %v931 = vadd.f32 %v861, %v913
    %v932 = vadd.f32 %v862, %v912
    %v933 = vadd.f32 %v863, %v913
    %v934 = vadd.f32 %v864, %v912
    %v935 = vadd.f32 %v865, %v913
    %v936 = vadd.f32 %v866, %v912
    %v937 = vadd.f32 %v867, %v913
    %v938 = vadd.f32 %v868, %v912
    %v939 = vadd.f32 %v869, %v913
    %v940 = vadd.f32 %v870, %v912
    %v941 = vadd.f32 %v871, %v913
    %v942 = vadd.f32 %v872, %v912
    %v943 = vadd.f32 %v873, %v913
    %v944 = vadd.f32 %v874, %v912
    %v945 = vadd.f32 %v875, %v913
    %v946 = vadd.f32 %v876, %v912
    %v947 = vadd.f32 %v877, %v913
    %v948 = vadd.f32 %v878, %v912
    %v949 = vadd.f32 %v879, %v913
    %v950 = vadd.f32 %v880, %v912
    %v951 = vadd.f32 %v881, %v913
    %v952 = vadd.f32 %v882, %v912
    %v953 = vadd.f32 %v883, %v913
    %v954 = vadd.f32 %v884, %v912
    %v955 = vadd.f32 %v885, %v913
    %v956 = vadd.f32 %v886, %v912
    %v957 = vadd.f32 %v887, %v913
    %v958 = vadd.f32 %v888, %v912
    %v959 = vadd.f32 %v889, %v913
    %v960 = vadd.f32 %v890, %v912
    %v961 = vadd.f32 %v891, %v913
    %v962 = vadd.f32 %v892, %v912
    %v963 = vadd.f32 %v893, %v913
    %v964 = vadd.f32 %v894, %v912
    %v965 = vadd.f32 %v895, %v913
    %v966 = vadd.f32 %v896, %v912
    %v967 = vadd.f32 %v897, %v913
    %v968 = vadd.f32 %v898, %v912
    %v969 = vadd.f32 %v899, %v913
    %v970 = vadd.f32 %v900, %v912
    %v971 = vadd.f32 %v901, %v913
    %v972 = vadd.f32 %v902, %v912
    %v973 = vadd.f32 %v903, %v913
    %v974 = vadd.f32 %v904, %v912
    %v975 = vadd.f32 %v905, %v913
    %v976 = vadd.f32 %v906, %v912
    %v977 = vadd.f32 %v907, %v913
    %v978 = vadd.f32 %v908, %v912
    %v979 = vadd.f32 %v909, %v913
    %v980 = vmax.f32 %v916, 0.0
    %v981 = vmax.f32 %v917, 0.0
    %v982 = vmax.f32 %v918, 0.0
    %v983 = vmax.f32 %v919, 0.0
    %v984 = vmax.f32 %v920, 0.0
    %v985 = vmax.f32 %v921, 0.0
    %v986 = vmax.f32 %v922, 0.0
    %v987 = vmax.f32 %v923, 0.0
    %v988 = vmax.f32 %v924, 0.0
    %v989 = vmax.f32 %v925, 0.0
    %v990 = vmax.f32 %v926, 0.0
    %v991 = vmax.f32 %v927, 0.0
    %v992 = vmax.f32 %v928, 0.0
    %v993 = vmax.f32 %v929, 0.0
    %v994 = vmax.f32 %v930, 0.0
    %v995 = vmax.f32 %v931, 0.0
    %v996 = vmax.f32 %v932, 0.0
    %v997 = vmax.f32 %v933, 0.0
    %v998 = vmax.f32 %v934, 0.0
    %v999 = vmax.f32 %v935, 0.0
    %v1000 = vmax.f32 %v936, 0.0
    %v1001 = vmax.f32 %v937, 0.0
    %v1002 = vmax.f32 %v938, 0.0
    %v1003 = vmax.f32 %v939, 0.0
    %v1004 = vmax.f32 %v940, 0.0
    %v1005 = vmax.f32 %v941, 0.0
    %v1006 = vmax.f32 %v942, 0.0
    %v1007 = vmax.f32 %v943, 0.0
    %v1008 = vmax.f32 %v944, 0.0
    %v1009 = vmax.f32 %v945, 0.0
    %v1010 = vmax.f32 %v946, 0.0
    %v1011 = vmax.f32 %v947, 0.0
    %v1012 = vmax.f32 %v948, 0.0
    %v1013 = vmax.f32 %v949, 0.0
    %v1014 = vmax.f32 %v950, 0.0
    %v1015 = vmax.f32 %v951, 0.0
    %v1016 = vmax.f32 %v952, 0.0
    %v1017 = vmax.f32 %v953, 0.0
    %v1018 = vmax.f32 %v954, 0.0
    %v1019 = vmax.f32 %v955, 0.0
    %v1020 = vmax.f32 %v956, 0.0
    %v1021 = vmax.f32 %v957, 0.0
    %v1022 = vmax.f32 %v958, 0.0
    %v1023 = vmax.f32 %v959, 0.0
    %v1024 = vmax.f32 %v960, 0.0
    %v1025 = vmax.f32 %v961, 0.0
    %v1026 = vmax.f32 %v962, 0.0
    %v1027 = vmax.f32 %v963, 0.0
    %v1028 = vmax.f32 %v964, 0.0
    %v1029 = vmax.f32 %v965, 0.0
    %v1030 = vmax.f32 %v966, 0.0
    %v1031 = vmax.f32 %v967, 0.0
    %v1032 = vmax.f32 %v968, 0.0
    %v1033 = vmax.f32 %v969, 0.0
    %v1034 = vmax.f32 %v970, 0.0
    %v1035 = vmax.f32 %v971, 0.0
    %v1036 = vmax.f32 %v972, 0.0
    %v1037 = vmax.f32 %v973, 0.0
    %v1038 = vmax.f32 %v974, 0.0
    %v1039 = vmax.f32 %v975, 0.0
    %v1040 = vmax.f32 %v976, 0.0
    %v1041 = vmax.f32 %v977, 0.0
    %v1042 = vmax.f32 %v978, 0.0
    %v1043 = vmax.f32 %v979, 0.0
    %v1044 = vpack.c.bf16 %v982, %v980
    %v1045 = vpack.c.bf16 %v983, %v981
    %v1046 = vpack.c.bf16 %v986, %v984
    %v1047 = vpack.c.bf16 %v987, %v985
    %v1048 = vpack.c.bf16 %v990, %v988
    %v1049 = vpack.c.bf16 %v991, %v989
    %v1050 = vpack.c.bf16 %v994, %v992
    %v1051 = vpack.c.bf16 %v995, %v993
    %v1052 = vpack.c.bf16 %v998, %v996
    %v1053 = vpack.c.bf16 %v999, %v997
    %v1054 = vpack.c.bf16 %v1002, %v1000
    %v1055 = vpack.c.bf16 %v1003, %v1001
    %v1056 = vpack.c.bf16 %v1006, %v1004
    %v1057 = vpack.c.bf16 %v1007, %v1005
    %v1058 = vpack.c.bf16 %v1010, %v1008
    %v1059 = vpack.c.bf16 %v1011, %v1009
    %v1060 = vpack.c.bf16 %v1014, %v1012
    %v1061 = vpack.c.bf16 %v1015, %v1013
    %v1062 = vpack.c.bf16 %v1018, %v1016
    %v1063 = vpack.c.bf16 %v1019, %v1017
    %v1064 = vpack.c.bf16 %v1022, %v1020
    %v1065 = vpack.c.bf16 %v1023, %v1021
    %v1066 = vpack.c.bf16 %v1026, %v1024
    %v1067 = vpack.c.bf16 %v1027, %v1025
    %v1068 = vpack.c.bf16 %v1030, %v1028
    %v1069 = vpack.c.bf16 %v1031, %v1029
    %v1070 = vpack.c.bf16 %v1034, %v1032
    %v1071 = vpack.c.bf16 %v1035, %v1033
    %v1072 = vpack.c.bf16 %v1038, %v1036
    %v1073 = vpack.c.bf16 %v1039, %v1037
    %v1074 = vpack.c.bf16 %v1042, %v1040
    %v1075 = vpack.c.bf16 %v1043, %v1041
    %v1076 = vld [vmem:[%s3] sm:$0xf]
    %v1077 = vld [vmem:[%s3 + $0x4] sm:$0xf]
    %v1078 = vld [vmem:[%s3 + $0x8] sm:$0xf]
    %v1079 = vld [vmem:[%s3 + $0xc] sm:$0xf]
    %v1080 = vld [vmem:[%s3 + $0x10] sm:$0xf]
    %v1081 = vld [vmem:[%s3 + $0x14] sm:$0xf]
    %v1082 = vld [vmem:[%s3 + $0x18] sm:$0xf]
    %v1083 = vld [vmem:[%s3 + $0x1c] sm:$0xf]
    %v1084 = vld [vmem:[%s3 + $0x20] sm:$0xf]
    %v1085 = vld [vmem:[%s3 + $0x24] sm:$0xf]
    %v1086 = vld [vmem:[%s3 + $0x28] sm:$0xf]
    %v1087 = vld [vmem:[%s3 + $0x2c] sm:$0xf]
    %v1088 = vld [vmem:[%s3 + $0x30] sm:$0xf]
    %v1089 = vld [vmem:[%s3 + $0x34] sm:$0xf]
    %v1090 = vld [vmem:[%s3 + $0x38] sm:$0xf]
    %v1091 = vld [vmem:[%s3 + $0x3c] sm:$0xf]
    %v1092 = vld [vmem:[%s3 + $0x40] sm:$0xf]
    %v1093 = vld [vmem:[%s3 + $0x44] sm:$0xf]
    %v1094 = vld [vmem:[%s3 + $0x48] sm:$0xf]
    %v1095 = vld [vmem:[%s3 + $0x4c] sm:$0xf]
    %v1096 = vld [vmem:[%s3 + $0x50] sm:$0xf]
    %v1097 = vld [vmem:[%s3 + $0x54] sm:$0xf]
    %v1098 = vld [vmem:[%s3 + $0x58] sm:$0xf]
    %v1099 = vld [vmem:[%s3 + $0x5c] sm:$0xf]
    %v1100 = vld [vmem:[%s3 + $0x60] sm:$0xf]
    %v1101 = vld [vmem:[%s3 + $0x64] sm:$0xf]
    %v1102 = vld [vmem:[%s3 + $0x68] sm:$0xf]
    %v1103 = vld [vmem:[%s3 + $0x6c] sm:$0xf]
    %v1104 = vld [vmem:[%s3 + $0x70] sm:$0xf]
    %v1105 = vld [vmem:[%s3 + $0x74] sm:$0xf]
    %v1106 = vld [vmem:[%s3 + $0x78] sm:$0xf]
    %v1107 = vld [vmem:[%s3 + $0x7c] sm:$0xf]
    %v1108 = vld [vmem:[#allocation4] sm:$0x1]
    %v1110 = vperm.slane %v1108, 0
    %v1144 = vunpack.c.l.b16 %v1076
    %v1145 = vunpack.c.l.b16 %v1077
    %v1146 = vunpack.c.l.b16 %v1078
    %v1147 = vunpack.c.l.b16 %v1079
    %v1148 = vunpack.c.l.b16 %v1080
    %v1149 = vunpack.c.l.b16 %v1081
    %v1150 = vunpack.c.l.b16 %v1082
    %v1151 = vunpack.c.l.b16 %v1083
    %v1152 = vunpack.c.l.b16 %v1084
    %v1153 = vunpack.c.l.b16 %v1085
    %v1154 = vunpack.c.l.b16 %v1086
    %v1155 = vunpack.c.l.b16 %v1087
    %v1156 = vunpack.c.l.b16 %v1088
    %v1157 = vunpack.c.l.b16 %v1089
    %v1158 = vunpack.c.l.b16 %v1090
    %v1159 = vunpack.c.l.b16 %v1091
    %v1160 = vunpack.c.l.b16 %v1092
    %v1161 = vunpack.c.l.b16 %v1093
    %v1162 = vunpack.c.l.b16 %v1094
    %v1163 = vunpack.c.l.b16 %v1095
    %v1164 = vunpack.c.l.b16 %v1096
    %v1165 = vunpack.c.l.b16 %v1097
    %v1166 = vunpack.c.l.b16 %v1098
    %v1167 = vunpack.c.l.b16 %v1099
    %v1168 = vunpack.c.l.b16 %v1100
    %v1169 = vunpack.c.l.b16 %v1101
    %v1170 = vunpack.c.l.b16 %v1102
    %v1171 = vunpack.c.l.b16 %v1103
    %v1172 = vunpack.c.l.b16 %v1104
    %v1173 = vunpack.c.l.b16 %v1105
    %v1174 = vunpack.c.l.b16 %v1106
    %v1175 = vunpack.c.l.b16 %v1107
    %v1176 = vpack.c.b16 %v1145, %v1144
    %v1177 = vpack.c.b16 %v1147, %v1146
    %v1178 = vpack.c.b16 %v1149, %v1148
    %v1179 = vpack.c.b16 %v1151, %v1150
    %v1180 = vpack.c.b16 %v1153, %v1152
    %v1181 = vpack.c.b16 %v1155, %v1154
    %v1182 = vpack.c.b16 %v1157, %v1156
    %v1183 = vpack.c.b16 %v1159, %v1158
    %v1184 = vpack.c.b16 %v1161, %v1160
    %v1185 = vpack.c.b16 %v1163, %v1162
    %v1186 = vpack.c.b16 %v1165, %v1164
    %v1187 = vpack.c.b16 %v1167, %v1166
    %v1188 = vpack.c.b16 %v1169, %v1168
    %v1189 = vpack.c.b16 %v1171, %v1170
    %v1190 = vpack.c.b16 %v1173, %v1172
    %v1191 = vpack.c.b16 %v1175, %v1174
    %1208 = vmatpush.bf16.msra.mxu0 %v1183
    %1209 = vmatpush.bf16.msra.mxu0 %v1182
    %1210 = vmatpush.bf16.msra.mxu0 %v1181
    %1211 = vmatpush.bf16.msra.mxu0 %v1180
    %1212 = vmatpush.bf16.msra.mxu0 %v1179
    %1213 = vmatpush.bf16.msra.mxu0 %v1178
    %1214 = vmatpush.bf16.msra.mxu0 %v1177
    %1215 = vmatpush.bf16.msra.mxu0 %v1176
    %1216 = vmatmul.bf16.gmra.mxu0 %v1044
    %v1217 = vpop.f32.mrf.mxu0
    %v1218 = vadd.f32 %v1110, %v1217
    %v1219 = vpop.f32.mrf.mxu0
    %v1220 = vadd.f32 %v1110, %v1219
    %1221 = vmatmul.bf16.gmra.mxu0 %v1046
    %v1222 = vpop.f32.mrf.mxu0
    %v1223 = vadd.f32 %v1110, %v1222
    %v1224 = vpop.f32.mrf.mxu0
    %v1225 = vadd.f32 %v1110, %v1224
    %1226 = vmatmul.bf16.gmra.mxu0 %v1048
    %v1227 = vpop.f32.mrf.mxu0
    %v1228 = vadd.f32 %v1110, %v1227
    %v1229 = vpop.f32.mrf.mxu0
    %v1230 = vadd.f32 %v1110, %v1229
    %1231 = vmatmul.bf16.gmra.mxu0 %v1050
    %v1232 = vpop.f32.mrf.mxu0
    %v1233 = vadd.f32 %v1110, %v1232
    %v1234 = vpop.f32.mrf.mxu0
    %v1235 = vadd.f32 %v1110, %v1234
    %1236 = vmatmul.bf16.gmra.mxu0 %v1052
    %v1237 = vpop.f32.mrf.mxu0
    %v1238 = vadd.f32 %v1110, %v1237
    %v1239 = vpop.f32.mrf.mxu0
    %v1240 = vadd.f32 %v1110, %v1239
    %1241 = vmatmul.bf16.gmra.mxu0 %v1054
    %v1242 = vpop.f32.mrf.mxu0
    %v1243 = vadd.f32 %v1110, %v1242
    %v1244 = vpop.f32.mrf.mxu0
    %v1245 = vadd.f32 %v1110, %v1244
    %1246 = vmatmul.bf16.gmra.mxu0 %v1056
    %v1247 = vpop.f32.mrf.mxu0
    %v1248 = vadd.f32 %v1110, %v1247
    %v1249 = vpop.f32.mrf.mxu0
    %v1250 = vadd.f32 %v1110, %v1249
    %1251 = vmatmul.bf16.gmra.mxu0 %v1058
    %v1252 = vpop.f32.mrf.mxu0
    %v1253 = vadd.f32 %v1110, %v1252
    %v1254 = vpop.f32.mrf.mxu0
    %v1255 = vadd.f32 %v1110, %v1254
    %1256 = vmatmul.bf16.gmra.mxu0 %v1060
    %v1257 = vpop.f32.mrf.mxu0
    %v1258 = vadd.f32 %v1110, %v1257
    %v1259 = vpop.f32.mrf.mxu0
    %v1260 = vadd.f32 %v1110, %v1259
    %1261 = vmatmul.bf16.gmra.mxu0 %v1062
    %v1262 = vpop.f32.mrf.mxu0
    %v1263 = vadd.f32 %v1110, %v1262
    %v1264 = vpop.f32.mrf.mxu0
    %v1265 = vadd.f32 %v1110, %v1264
    %1266 = vmatmul.bf16.gmra.mxu0 %v1064
    %v1267 = vpop.f32.mrf.mxu0
    %v1268 = vadd.f32 %v1110, %v1267
    %v1269 = vpop.f32.mrf.mxu0
    %v1270 = vadd.f32 %v1110, %v1269
    %1271 = vmatmul.bf16.gmra.mxu0 %v1066
    %v1272 = vpop.f32.mrf.mxu0
    %v1273 = vadd.f32 %v1110, %v1272
    %v1274 = vpop.f32.mrf.mxu0
    %v1275 = vadd.f32 %v1110, %v1274
    %1276 = vmatmul.bf16.gmra.mxu0 %v1068
    %v1277 = vpop.f32.mrf.mxu0
    %v1278 = vadd.f32 %v1110, %v1277
    %v1279 = vpop.f32.mrf.mxu0
    %v1280 = vadd.f32 %v1110, %v1279
    %1281 = vmatmul.bf16.gmra.mxu0 %v1070
    %v1282 = vpop.f32.mrf.mxu0
    %v1283 = vadd.f32 %v1110, %v1282
    %v1284 = vpop.f32.mrf.mxu0
    %v1285 = vadd.f32 %v1110, %v1284
    %1286 = vmatmul.bf16.gmra.mxu0 %v1072
    %v1287 = vpop.f32.mrf.mxu0
    %v1288 = vadd.f32 %v1110, %v1287
    %v1289 = vpop.f32.mrf.mxu0
    %v1290 = vadd.f32 %v1110, %v1289
    %1291 = vmatmul.bf16.gmra.mxu0 %v1074
    %v1292 = vpop.f32.mrf.mxu0
    %v1293 = vadd.f32 %v1110, %v1292
    %v1294 = vpop.f32.mrf.mxu0
    %v1295 = vadd.f32 %v1110, %v1294
    %1296 = vdwg.mxu0
    %1297 = vmatpush.bf16.msra.mxu0 %v1191
    %1298 = vmatpush.bf16.msra.mxu0 %v1190
    %1299 = vmatpush.bf16.msra.mxu0 %v1189
    %1300 = vmatpush.bf16.msra.mxu0 %v1188
    %1301 = vmatpush.bf16.msra.mxu0 %v1187
    %1302 = vmatpush.bf16.msra.mxu0 %v1186
    %1303 = vmatpush.bf16.msra.mxu0 %v1185
    %1304 = vmatpush.bf16.msra.mxu0 %v1184
    %1305 = vmatmul.bf16.gmra.mxu0 %v1045
    %v1306 = vpop.f32.mrf.mxu0
    %v1307 = vadd.f32 %v1218, %v1306
    %v1308 = vpop.f32.mrf.mxu0
    %v1309 = vadd.f32 %v1220, %v1308
    %1310 = vmatmul.bf16.gmra.mxu0 %v1047
    %v1311 = vpop.f32.mrf.mxu0
    %v1312 = vadd.f32 %v1223, %v1311
    %v1313 = vpop.f32.mrf.mxu0
    %v1314 = vadd.f32 %v1225, %v1313
    %1315 = vmatmul.bf16.gmra.mxu0 %v1049
    %v1316 = vpop.f32.mrf.mxu0
    %v1317 = vadd.f32 %v1228, %v1316
    %v1318 = vpop.f32.mrf.mxu0
    %v1319 = vadd.f32 %v1230, %v1318
    %1320 = vmatmul.bf16.gmra.mxu0 %v1051
    %v1321 = vpop.f32.mrf.mxu0
    %v1322 = vadd.f32 %v1233, %v1321
    %v1323 = vpop.f32.mrf.mxu0
    %v1324 = vadd.f32 %v1235, %v1323
    %1325 = vmatmul.bf16.gmra.mxu0 %v1053
    %v1326 = vpop.f32.mrf.mxu0
    %v1327 = vadd.f32 %v1238, %v1326
    %v1328 = vpop.f32.mrf.mxu0
    %v1329 = vadd.f32 %v1240, %v1328
    %1330 = vmatmul.bf16.gmra.mxu0 %v1055
    %v1331 = vpop.f32.mrf.mxu0
    %v1332 = vadd.f32 %v1243, %v1331
    %v1333 = vpop.f32.mrf.mxu0
    %v1334 = vadd.f32 %v1245, %v1333
    %1335 = vmatmul.bf16.gmra.mxu0 %v1057
    %v1336 = vpop.f32.mrf.mxu0
    %v1337 = vadd.f32 %v1248, %v1336
    %v1338 = vpop.f32.mrf.mxu0
    %v1339 = vadd.f32 %v1250, %v1338
    %1340 = vmatmul.bf16.gmra.mxu0 %v1059
    %v1341 = vpop.f32.mrf.mxu0
    %v1342 = vadd.f32 %v1253, %v1341
    %v1343 = vpop.f32.mrf.mxu0
    %v1344 = vadd.f32 %v1255, %v1343
    %1345 = vmatmul.bf16.gmra.mxu0 %v1061
    %v1346 = vpop.f32.mrf.mxu0
    %v1347 = vadd.f32 %v1258, %v1346
    %v1348 = vpop.f32.mrf.mxu0
    %v1349 = vadd.f32 %v1260, %v1348
    %1350 = vmatmul.bf16.gmra.mxu0 %v1063
    %v1351 = vpop.f32.mrf.mxu0
    %v1352 = vadd.f32 %v1263, %v1351
    %v1353 = vpop.f32.mrf.mxu0
    %v1354 = vadd.f32 %v1265, %v1353
    %1355 = vmatmul.bf16.gmra.mxu0 %v1065
    %v1356 = vpop.f32.mrf.mxu0
    %v1357 = vadd.f32 %v1268, %v1356
    %v1358 = vpop.f32.mrf.mxu0
    %v1359 = vadd.f32 %v1270, %v1358
    %1360 = vmatmul.bf16.gmra.mxu0 %v1067
    %v1361 = vpop.f32.mrf.mxu0
    %v1362 = vadd.f32 %v1273, %v1361
    %v1363 = vpop.f32.mrf.mxu0
    %v1364 = vadd.f32 %v1275, %v1363
    %1365 = vmatmul.bf16.gmra.mxu0 %v1069
    %v1366 = vpop.f32.mrf.mxu0
    %v1367 = vadd.f32 %v1278, %v1366
    %v1368 = vpop.f32.mrf.mxu0
    %v1369 = vadd.f32 %v1280, %v1368
    %1370 = vmatmul.bf16.gmra.mxu0 %v1071
    %v1371 = vpop.f32.mrf.mxu0
    %v1372 = vadd.f32 %v1283, %v1371
    %v1373 = vpop.f32.mrf.mxu0
    %v1374 = vadd.f32 %v1285, %v1373
    %1375 = vmatmul.bf16.gmra.mxu0 %v1073
    %v1376 = vpop.f32.mrf.mxu0
    %v1377 = vadd.f32 %v1288, %v1376
    %v1378 = vpop.f32.mrf.mxu0
    %v1379 = vadd.f32 %v1290, %v1378
    %1380 = vmatmul.bf16.gmra.mxu0 %v1075
    %v1381 = vpop.f32.mrf.mxu0
    %v1382 = vadd.f32 %v1293, %v1381
    %v1383 = vpop.f32.mrf.mxu0
    %v1384 = vadd.f32 %v1295, %v1383
    %1385 = vdwg.mxu0
    %v1386 = vmax.f32 %v1307, 0.0
    %v1387 = vmax.f32 %v1309, 0.0
    %v1388 = vmax.f32 %v1312, 0.0
    %v1389 = vmax.f32 %v1314, 0.0
    %v1390 = vmax.f32 %v1317, 0.0
    %v1391 = vmax.f32 %v1319, 0.0
    %v1392 = vmax.f32 %v1322, 0.0
    %v1393 = vmax.f32 %v1324, 0.0
    %v1394 = vmax.f32 %v1327, 0.0
    %v1395 = vmax.f32 %v1329, 0.0
    %v1396 = vmax.f32 %v1332, 0.0
    %v1397 = vmax.f32 %v1334, 0.0
    %v1398 = vmax.f32 %v1337, 0.0
    %v1399 = vmax.f32 %v1339, 0.0
    %v1400 = vmax.f32 %v1342, 0.0
    %v1401 = vmax.f32 %v1344, 0.0
    %v1402 = vmax.f32 %v1347, 0.0
    %v1403 = vmax.f32 %v1349, 0.0
    %v1404 = vmax.f32 %v1352, 0.0
    %v1405 = vmax.f32 %v1354, 0.0
    %v1406 = vmax.f32 %v1357, 0.0
    %v1407 = vmax.f32 %v1359, 0.0
    %v1408 = vmax.f32 %v1362, 0.0
    %v1409 = vmax.f32 %v1364, 0.0
    %v1410 = vmax.f32 %v1367, 0.0
    %v1411 = vmax.f32 %v1369, 0.0
    %v1412 = vmax.f32 %v1372, 0.0
    %v1413 = vmax.f32 %v1374, 0.0
    %v1414 = vmax.f32 %v1377, 0.0
    %v1415 = vmax.f32 %v1379, 0.0
    %v1416 = vmax.f32 %v1382, 0.0
    %v1417 = vmax.f32 %v1384, 0.0
    %v1418 = vpack.c.bf16 %v1387, %v1386
    %v1419 = vpack.c.bf16 %v1389, %v1388
    %v1420 = vpack.c.bf16 %v1391, %v1390
    %v1421 = vpack.c.bf16 %v1393, %v1392
    %v1422 = vpack.c.bf16 %v1395, %v1394
    %v1423 = vpack.c.bf16 %v1397, %v1396
    %v1424 = vpack.c.bf16 %v1399, %v1398
    %v1425 = vpack.c.bf16 %v1401, %v1400
    %v1426 = vpack.c.bf16 %v1403, %v1402
    %v1427 = vpack.c.bf16 %v1405, %v1404
    %v1428 = vpack.c.bf16 %v1407, %v1406
    %v1429 = vpack.c.bf16 %v1409, %v1408
    %v1430 = vpack.c.bf16 %v1411, %v1410
    %v1431 = vpack.c.bf16 %v1413, %v1412
    %v1432 = vpack.c.bf16 %v1415, %v1414
    %v1433 = vpack.c.bf16 %v1417, %v1416
    %v1434 = vld [vmem:[#allocation6] sm:$0xf]
    %v1435 = vld [vmem:[#allocation6 + $0x4] sm:$0xf]
    %v1436 = vld [vmem:[#allocation6 + $0x8] sm:$0xf]
    %v1437 = vld [vmem:[#allocation6 + $0xc] sm:$0xf]
    %v1438 = vld [vmem:[#allocation6 + $0x10] sm:$0xf]
    %v1439 = vld [vmem:[#allocation6 + $0x14] sm:$0xf]
    %v1440 = vld [vmem:[#allocation6 + $0x18] sm:$0xf]
    %v1441 = vld [vmem:[#allocation6 + $0x1c] sm:$0xf]
    %v1442 = vld [vmem:[#allocation6 + $0x20] sm:$0xf]
    %v1443 = vld [vmem:[#allocation6 + $0x24] sm:$0xf]
    %v1444 = vld [vmem:[#allocation6 + $0x28] sm:$0xf]
    %v1445 = vld [vmem:[#allocation6 + $0x2c] sm:$0xf]
    %v1446 = vld [vmem:[#allocation6 + $0x30] sm:$0xf]
    %v1447 = vld [vmem:[#allocation6 + $0x34] sm:$0xf]
    %v1448 = vld [vmem:[#allocation6 + $0x38] sm:$0xf]
    %v1449 = vld [vmem:[#allocation6 + $0x3c] sm:$0xf]
    %v1450 = vld [vmem:[#allocation7] sm:$0x1]
    %v1452 = vperm.slane %v1450, 0
    %v1470 = vunpack.c.l.b16 %v1434
    %v1471 = vunpack.c.l.b16 %v1435
    %v1472 = vunpack.c.l.b16 %v1436
    %v1473 = vunpack.c.l.b16 %v1437
    %v1474 = vunpack.c.l.b16 %v1438
    %v1475 = vunpack.c.l.b16 %v1439
    %v1476 = vunpack.c.l.b16 %v1440
    %v1477 = vunpack.c.l.b16 %v1441
    %v1478 = vunpack.c.l.b16 %v1442
    %v1479 = vunpack.c.l.b16 %v1443
    %v1480 = vunpack.c.l.b16 %v1444
    %v1481 = vunpack.c.l.b16 %v1445
    %v1482 = vunpack.c.l.b16 %v1446
    %v1483 = vunpack.c.l.b16 %v1447
    %v1484 = vunpack.c.l.b16 %v1448
    %v1485 = vunpack.c.l.b16 %v1449
    %v1486 = vpack.c.b16 %v1471, %v1470
    %v1487 = vpack.c.b16 %v1473, %v1472
    %v1488 = vpack.c.b16 %v1475, %v1474
    %v1489 = vpack.c.b16 %v1477, %v1476
    %v1490 = vpack.c.b16 %v1479, %v1478
    %v1491 = vpack.c.b16 %v1481, %v1480
    %v1492 = vpack.c.b16 %v1483, %v1482
    %v1493 = vpack.c.b16 %v1485, %v1484
    %1502 = vmatpush.bf16.msra.mxu0 %v1493
    %1503 = vmatpush.bf16.msra.mxu0 %v1492
    %1504 = vmatpush.bf16.msra.mxu0 %v1491
    %1505 = vmatpush.bf16.msra.mxu0 %v1490
    %1506 = vmatpush.bf16.msra.mxu0 %v1489
    %1507 = vmatpush.bf16.msra.mxu0 %v1488
    %1508 = vmatpush.bf16.msra.mxu0 %v1487
    %1509 = vmatpush.bf16.msra.mxu0 %v1486
    %1510 = vmatmul.bf16.gmra.mxu0 %v1418
    %v1511 = vpop.f32.mrf.mxu0
    %v1512 = vadd.f32 %v1452, %v1511
    %v1513 = vpop.f32.mrf.mxu0
    %v1514 = vadd.f32 %v1452, %v1513
    %1515 = vmatmul.bf16.gmra.mxu0 %v1419
    %v1516 = vpop.f32.mrf.mxu0
    %v1517 = vadd.f32 %v1452, %v1516
    %v1518 = vpop.f32.mrf.mxu0
    %v1519 = vadd.f32 %v1452, %v1518
    %1520 = vmatmul.bf16.gmra.mxu0 %v1420
    %v1521 = vpop.f32.mrf.mxu0
    %v1522 = vadd.f32 %v1452, %v1521
    %v1523 = vpop.f32.mrf.mxu0
    %v1524 = vadd.f32 %v1452, %v1523
    %1525 = vmatmul.bf16.gmra.mxu0 %v1421
    %v1526 = vpop.f32.mrf.mxu0
    %v1527 = vadd.f32 %v1452, %v1526
    %v1528 = vpop.f32.mrf.mxu0
    %v1529 = vadd.f32 %v1452, %v1528
    %1530 = vmatmul.bf16.gmra.mxu0 %v1422
    %v1531 = vpop.f32.mrf.mxu0
    %v1532 = vadd.f32 %v1452, %v1531
    %v1533 = vpop.f32.mrf.mxu0
    %v1534 = vadd.f32 %v1452, %v1533
    %1535 = vmatmul.bf16.gmra.mxu0 %v1423
    %v1536 = vpop.f32.mrf.mxu0
    %v1537 = vadd.f32 %v1452, %v1536
    %v1538 = vpop.f32.mrf.mxu0
    %v1539 = vadd.f32 %v1452, %v1538
    %1540 = vmatmul.bf16.gmra.mxu0 %v1424
    %v1541 = vpop.f32.mrf.mxu0
    %v1542 = vadd.f32 %v1452, %v1541
    %v1543 = vpop.f32.mrf.mxu0
    %v1544 = vadd.f32 %v1452, %v1543
    %1545 = vmatmul.bf16.gmra.mxu0 %v1425
    %v1546 = vpop.f32.mrf.mxu0
    %v1547 = vadd.f32 %v1452, %v1546
    %v1548 = vpop.f32.mrf.mxu0
    %v1549 = vadd.f32 %v1452, %v1548
    %1550 = vmatmul.bf16.gmra.mxu0 %v1426
    %v1551 = vpop.f32.mrf.mxu0
    %v1552 = vadd.f32 %v1452, %v1551
    %v1553 = vpop.f32.mrf.mxu0
    %v1554 = vadd.f32 %v1452, %v1553
    %1555 = vmatmul.bf16.gmra.mxu0 %v1427
    %v1556 = vpop.f32.mrf.mxu0
    %v1557 = vadd.f32 %v1452, %v1556
    %v1558 = vpop.f32.mrf.mxu0
    %v1559 = vadd.f32 %v1452, %v1558
    %1560 = vmatmul.bf16.gmra.mxu0 %v1428
    %v1561 = vpop.f32.mrf.mxu0
    %v1562 = vadd.f32 %v1452, %v1561
    %v1563 = vpop.f32.mrf.mxu0
    %v1564 = vadd.f32 %v1452, %v1563
    %1565 = vmatmul.bf16.gmra.mxu0 %v1429
    %v1566 = vpop.f32.mrf.mxu0
    %v1567 = vadd.f32 %v1452, %v1566
    %v1568 = vpop.f32.mrf.mxu0
    %v1569 = vadd.f32 %v1452, %v1568
    %1570 = vmatmul.bf16.gmra.mxu0 %v1430
    %v1571 = vpop.f32.mrf.mxu0
    %v1572 = vadd.f32 %v1452, %v1571
    %v1573 = vpop.f32.mrf.mxu0
    %v1574 = vadd.f32 %v1452, %v1573
    %1575 = vmatmul.bf16.gmra.mxu0 %v1431
    %v1576 = vpop.f32.mrf.mxu0
    %v1577 = vadd.f32 %v1452, %v1576
    %v1578 = vpop.f32.mrf.mxu0
    %v1579 = vadd.f32 %v1452, %v1578
    %1580 = vmatmul.bf16.gmra.mxu0 %v1432
    %v1581 = vpop.f32.mrf.mxu0
    %v1582 = vadd.f32 %v1452, %v1581
    %v1583 = vpop.f32.mrf.mxu0
    %v1584 = vadd.f32 %v1452, %v1583
    %1585 = vmatmul.bf16.gmra.mxu0 %v1433
    %v1586 = vpop.f32.mrf.mxu0
    %v1587 = vadd.f32 %v1452, %v1586
    %v1588 = vpop.f32.mrf.mxu0
    %v1589 = vadd.f32 %v1452, %v1588
    %1590 = vdwg.mxu0
    %v1591 = vmax.f32 %v1512, 0.0
    %v1592 = vmax.f32 %v1514, 0.0
    %v1593 = vmax.f32 %v1517, 0.0
    %v1594 = vmax.f32 %v1519, 0.0
    %v1595 = vmax.f32 %v1522, 0.0
    %v1596 = vmax.f32 %v1524, 0.0
    %v1597 = vmax.f32 %v1527, 0.0
    %v1598 = vmax.f32 %v1529, 0.0
    %v1599 = vmax.f32 %v1532, 0.0
    %v1600 = vmax.f32 %v1534, 0.0
    %v1601 = vmax.f32 %v1537, 0.0
    %v1602 = vmax.f32 %v1539, 0.0
    %v1603 = vmax.f32 %v1542, 0.0
    %v1604 = vmax.f32 %v1544, 0.0
    %v1605 = vmax.f32 %v1547, 0.0
    %v1606 = vmax.f32 %v1549, 0.0
    %v1607 = vmax.f32 %v1552, 0.0
    %v1608 = vmax.f32 %v1554, 0.0
    %v1609 = vmax.f32 %v1557, 0.0
    %v1610 = vmax.f32 %v1559, 0.0
    %v1611 = vmax.f32 %v1562, 0.0
    %v1612 = vmax.f32 %v1564, 0.0
    %v1613 = vmax.f32 %v1567, 0.0
    %v1614 = vmax.f32 %v1569, 0.0
    %v1615 = vmax.f32 %v1572, 0.0
    %v1616 = vmax.f32 %v1574, 0.0
    %v1617 = vmax.f32 %v1577, 0.0
    %v1618 = vmax.f32 %v1579, 0.0
    %v1619 = vmax.f32 %v1582, 0.0
    %v1620 = vmax.f32 %v1584, 0.0
    %v1621 = vmax.f32 %v1587, 0.0
    %v1622 = vmax.f32 %v1589, 0.0
    %v1623 = vpack.c.bf16 %v1592, %v1591
    %v1624 = vpack.c.bf16 %v1594, %v1593
    %v1625 = vpack.c.bf16 %v1596, %v1595
    %v1626 = vpack.c.bf16 %v1598, %v1597
    %v1627 = vpack.c.bf16 %v1600, %v1599
    %v1628 = vpack.c.bf16 %v1602, %v1601
    %v1629 = vpack.c.bf16 %v1604, %v1603
    %v1630 = vpack.c.bf16 %v1606, %v1605
    %v1631 = vpack.c.bf16 %v1608, %v1607
    %v1632 = vpack.c.bf16 %v1610, %v1609
    %v1633 = vpack.c.bf16 %v1612, %v1611
    %v1634 = vpack.c.bf16 %v1614, %v1613
    %v1635 = vpack.c.bf16 %v1616, %v1615
    %v1636 = vpack.c.bf16 %v1618, %v1617
    %v1637 = vpack.c.bf16 %v1620, %v1619
    %v1638 = vpack.c.bf16 %v1622, %v1621
    %v1639 = vld [vmem:[%s7] sm:$0xff]
    %v1640 = vld [vmem:[%s7 + $0x8] sm:$0xff]
    %v1641 = vld [vmem:[%s7 + $0x10] sm:$0xff]
    %v1642 = vld [vmem:[%s7 + $0x18] sm:$0xff]
    %v1643 = vld [vmem:[%s7 + $0x20] sm:$0xff]
    %v1644 = vld [vmem:[%s7 + $0x28] sm:$0xff]
    %v1645 = vld [vmem:[%s7 + $0x30] sm:$0xff]
    %v1646 = vld [vmem:[%s7 + $0x38] sm:$0xff]
    %v1647 = vld [vmem:[%s7 + $0x40] sm:$0xff]
    %v1648 = vld [vmem:[%s7 + $0x48] sm:$0xff]
    %v1649 = vld [vmem:[%s7 + $0x50] sm:$0xff]
    %v1650 = vld [vmem:[%s7 + $0x58] sm:$0xff]
    %v1651 = vld [vmem:[%s7 + $0x60] sm:$0xff]
    %v1652 = vld [vmem:[%s7 + $0x68] sm:$0xff]
    %v1653 = vld [vmem:[%s7 + $0x70] sm:$0xff]
    %v1654 = vld [vmem:[%s7 + $0x78] sm:$0xff]
    %v1655 = vld [vmem:[#allocation9] sm:$0x3]
    %v1657 = vperm.slane %v1655, 0
    %v1658 = vperm.slane %v1655, 1
    %v1677 = vunpack.c.l.b16 %v1639
    %v1678 = vunpack.c.h.b16 %v1639
    %v1679 = vunpack.c.l.b16 %v1640
    %v1680 = vunpack.c.h.b16 %v1640
    %v1681 = vunpack.c.l.b16 %v1641
    %v1682 = vunpack.c.h.b16 %v1641
    %v1683 = vunpack.c.l.b16 %v1642
    %v1684 = vunpack.c.h.b16 %v1642
    %v1685 = vunpack.c.l.b16 %v1643
    %v1686 = vunpack.c.h.b16 %v1643
    %v1687 = vunpack.c.l.b16 %v1644
    %v1688 = vunpack.c.h.b16 %v1644
    %v1689 = vunpack.c.l.b16 %v1645
    %v1690 = vunpack.c.h.b16 %v1645
    %v1691 = vunpack.c.l.b16 %v1646
    %v1692 = vunpack.c.h.b16 %v1646
    %v1693 = vunpack.c.l.b16 %v1647
    %v1694 = vunpack.c.h.b16 %v1647
    %v1695 = vunpack.c.l.b16 %v1648
    %v1696 = vunpack.c.h.b16 %v1648
    %v1697 = vunpack.c.l.b16 %v1649
    %v1698 = vunpack.c.h.b16 %v1649
    %v1699 = vunpack.c.l.b16 %v1650
    %v1700 = vunpack.c.h.b16 %v1650
    %v1701 = vunpack.c.l.b16 %v1651
    %v1702 = vunpack.c.h.b16 %v1651
    %v1703 = vunpack.c.l.b16 %v1652
    %v1704 = vunpack.c.h.b16 %v1652
    %v1705 = vunpack.c.l.b16 %v1653
    %v1706 = vunpack.c.h.b16 %v1653
    %v1707 = vunpack.c.l.b16 %v1654
    %v1708 = vunpack.c.h.b16 %v1654
    %v1709 = vpack.c.b16 %v1679, %v1677
    %v1710 = vpack.c.b16 %v1680, %v1678
    %v1711 = vpack.c.b16 %v1683, %v1681
    %v1712 = vpack.c.b16 %v1684, %v1682
    %v1713 = vpack.c.b16 %v1687, %v1685
    %v1714 = vpack.c.b16 %v1688, %v1686
    %v1715 = vpack.c.b16 %v1691, %v1689
    %v1716 = vpack.c.b16 %v1692, %v1690
    %v1717 = vpack.c.b16 %v1695, %v1693
    %v1718 = vpack.c.b16 %v1696, %v1694
    %v1719 = vpack.c.b16 %v1699, %v1697
    %v1720 = vpack.c.b16 %v1700, %v1698
    %v1721 = vpack.c.b16 %v1703, %v1701
    %v1722 = vpack.c.b16 %v1704, %v1702
    %v1723 = vpack.c.b16 %v1707, %v1705
    %v1724 = vpack.c.b16 %v1708, %v1706
    %1741 = vmatpush.bf16.msra.mxu0 %v1723
    %1742 = vmatpush.bf16.msra.mxu0 %v1721
    %1743 = vmatpush.bf16.msra.mxu0 %v1719
    %1744 = vmatpush.bf16.msra.mxu0 %v1717
    %1745 = vmatpush.bf16.msra.mxu0 %v1715
    %1746 = vmatpush.bf16.msra.mxu0 %v1713
    %1747 = vmatpush.bf16.msra.mxu0 %v1711
    %1748 = vmatpush.bf16.msra.mxu0 %v1709
    %1749 = vmatmul.bf16.gmra.mxu0 %v1623
    %v1750 = vpop.f32.mrf.mxu0
    %v1751 = vadd.f32 %v1657, %v1750
    %v1752 = vpop.f32.mrf.mxu0
    %v1753 = vadd.f32 %v1657, %v1752
    %1754 = vmatmul.bf16.gmra.mxu0 %v1624
    %v1755 = vpop.f32.mrf.mxu0
    %v1756 = vadd.f32 %v1657, %v1755
    %v1757 = vpop.f32.mrf.mxu0
    %v1758 = vadd.f32 %v1657, %v1757
    %1759 = vmatmul.bf16.gmra.mxu0 %v1625
    %v1760 = vpop.f32.mrf.mxu0
    %v1761 = vadd.f32 %v1657, %v1760
    %v1762 = vpop.f32.mrf.mxu0
    %v1763 = vadd.f32 %v1657, %v1762
    %1764 = vmatmul.bf16.gmra.mxu0 %v1626
    %v1765 = vpop.f32.mrf.mxu0
    %v1766 = vadd.f32 %v1657, %v1765
    %v1767 = vpop.f32.mrf.mxu0
    %v1768 = vadd.f32 %v1657, %v1767
    %1769 = vmatmul.bf16.gmra.mxu0 %v1627
    %v1770 = vpop.f32.mrf.mxu0
    %v1771 = vadd.f32 %v1657, %v1770
    %v1772 = vpop.f32.mrf.mxu0
    %v1773 = vadd.f32 %v1657, %v1772
    %1774 = vmatmul.bf16.gmra.mxu0 %v1628
    %v1775 = vpop.f32.mrf.mxu0
    %v1776 = vadd.f32 %v1657, %v1775
    %v1777 = vpop.f32.mrf.mxu0
    %v1778 = vadd.f32 %v1657, %v1777
    %1779 = vmatmul.bf16.gmra.mxu0 %v1629
    %v1780 = vpop.f32.mrf.mxu0
    %v1781 = vadd.f32 %v1657, %v1780
    %v1782 = vpop.f32.mrf.mxu0
    %v1783 = vadd.f32 %v1657, %v1782
    %1784 = vmatmul.bf16.gmra.mxu0 %v1630
    %v1785 = vpop.f32.mrf.mxu0
    %v1786 = vadd.f32 %v1657, %v1785
    %v1787 = vpop.f32.mrf.mxu0
    %v1788 = vadd.f32 %v1657, %v1787
    %1789 = vmatmul.bf16.gmra.mxu0 %v1631
    %v1790 = vpop.f32.mrf.mxu0
    %v1791 = vadd.f32 %v1657, %v1790
    %v1792 = vpop.f32.mrf.mxu0
    %v1793 = vadd.f32 %v1657, %v1792
    %1794 = vmatmul.bf16.gmra.mxu0 %v1632
    %v1795 = vpop.f32.mrf.mxu0
    %v1796 = vadd.f32 %v1657, %v1795
    %v1797 = vpop.f32.mrf.mxu0
    %v1798 = vadd.f32 %v1657, %v1797
    %1799 = vmatmul.bf16.gmra.mxu0 %v1633
    %v1800 = vpop.f32.mrf.mxu0
    %v1801 = vadd.f32 %v1657, %v1800
    %v1802 = vpop.f32.mrf.mxu0
    %v1803 = vadd.f32 %v1657, %v1802
    %1804 = vmatmul.bf16.gmra.mxu0 %v1634
    %v1805 = vpop.f32.mrf.mxu0
    %v1806 = vadd.f32 %v1657, %v1805
    %v1807 = vpop.f32.mrf.mxu0
    %v1808 = vadd.f32 %v1657, %v1807
    %1809 = vmatmul.bf16.gmra.mxu0 %v1635
    %v1810 = vpop.f32.mrf.mxu0
    %v1811 = vadd.f32 %v1657, %v1810
    %v1812 = vpop.f32.mrf.mxu0
    %v1813 = vadd.f32 %v1657, %v1812
    %1814 = vmatmul.bf16.gmra.mxu0 %v1636
    %v1815 = vpop.f32.mrf.mxu0
    %v1816 = vadd.f32 %v1657, %v1815
    %v1817 = vpop.f32.mrf.mxu0
    %v1818 = vadd.f32 %v1657, %v1817
    %1819 = vmatmul.bf16.gmra.mxu0 %v1637
    %v1820 = vpop.f32.mrf.mxu0
    %v1821 = vadd.f32 %v1657, %v1820
    %v1822 = vpop.f32.mrf.mxu0
    %v1823 = vadd.f32 %v1657, %v1822
    %1824 = vmatmul.bf16.gmra.mxu0 %v1638
    %v1825 = vpop.f32.mrf.mxu0
    %v1826 = vadd.f32 %v1657, %v1825
    %v1827 = vpop.f32.mrf.mxu0
    %v1828 = vadd.f32 %v1657, %v1827
    %1829 = vdwg.mxu0
    %1830 = vmatpush.bf16.msra.mxu0 %v1724
    %1831 = vmatpush.bf16.msra.mxu0 %v1722
    %1832 = vmatpush.bf16.msra.mxu0 %v1720
    %1833 = vmatpush.bf16.msra.mxu0 %v1718
    %1834 = vmatpush.bf16.msra.mxu0 %v1716
    %1835 = vmatpush.bf16.msra.mxu0 %v1714
    %1836 = vmatpush.bf16.msra.mxu0 %v1712
    %1837 = vmatpush.bf16.msra.mxu0 %v1710
    %1838 = vmatmul.bf16.gmra.mxu0 %v1623
    %v1839 = vpop.f32.mrf.mxu0
    %v1840 = vadd.f32 %v1658, %v1839
    %v1841 = vpop.f32.mrf.mxu0
    %v1842 = vadd.f32 %v1658, %v1841
    %1843 = vmatmul.bf16.gmra.mxu0 %v1624
    %v1844 = vpop.f32.mrf.mxu0
    %v1845 = vadd.f32 %v1658, %v1844
    %v1846 = vpop.f32.mrf.mxu0
    %v1847 = vadd.f32 %v1658, %v1846
    %1848 = vmatmul.bf16.gmra.mxu0 %v1625
    %v1849 = vpop.f32.mrf.mxu0
    %v1850 = vadd.f32 %v1658, %v1849
    %v1851 = vpop.f32.mrf.mxu0
    %v1852 = vadd.f32 %v1658, %v1851
    %1853 = vmatmul.bf16.gmra.mxu0 %v1626
    %v1854 = vpop.f32.mrf.mxu0
    %v1855 = vadd.f32 %v1658, %v1854
    %v1856 = vpop.f32.mrf.mxu0
    %v1857 = vadd.f32 %v1658, %v1856
    %1858 = vmatmul.bf16.gmra.mxu0 %v1627
    %v1859 = vpop.f32.mrf.mxu0
    %v1860 = vadd.f32 %v1658, %v1859
    %v1861 = vpop.f32.mrf.mxu0
    %v1862 = vadd.f32 %v1658, %v1861
    %1863 = vmatmul.bf16.gmra.mxu0 %v1628
    %v1864 = vpop.f32.mrf.mxu0
    %v1865 = vadd.f32 %v1658, %v1864
    %v1866 = vpop.f32.mrf.mxu0
    %v1867 = vadd.f32 %v1658, %v1866
    %1868 = vmatmul.bf16.gmra.mxu0 %v1629
    %v1869 = vpop.f32.mrf.mxu0
    %v1870 = vadd.f32 %v1658, %v1869
    %v1871 = vpop.f32.mrf.mxu0
    %v1872 = vadd.f32 %v1658, %v1871
    %1873 = vmatmul.bf16.gmra.mxu0 %v1630
    %v1874 = vpop.f32.mrf.mxu0
    %v1875 = vadd.f32 %v1658, %v1874
    %v1876 = vpop.f32.mrf.mxu0
    %v1877 = vadd.f32 %v1658, %v1876
    %1878 = vmatmul.bf16.gmra.mxu0 %v1631
    %v1879 = vpop.f32.mrf.mxu0
    %v1880 = vadd.f32 %v1658, %v1879
    %v1881 = vpop.f32.mrf.mxu0
    %v1882 = vadd.f32 %v1658, %v1881
    %1883 = vmatmul.bf16.gmra.mxu0 %v1632
    %v1884 = vpop.f32.mrf.mxu0
    %v1885 = vadd.f32 %v1658, %v1884
    %v1886 = vpop.f32.mrf.mxu0
    %v1887 = vadd.f32 %v1658, %v1886
    %1888 = vmatmul.bf16.gmra.mxu0 %v1633
    %v1889 = vpop.f32.mrf.mxu0
    %v1890 = vadd.f32 %v1658, %v1889
    %v1891 = vpop.f32.mrf.mxu0
    %v1892 = vadd.f32 %v1658, %v1891
    %1893 = vmatmul.bf16.gmra.mxu0 %v1634
    %v1894 = vpop.f32.mrf.mxu0
    %v1895 = vadd.f32 %v1658, %v1894
    %v1896 = vpop.f32.mrf.mxu0
    %v1897 = vadd.f32 %v1658, %v1896
    %1898 = vmatmul.bf16.gmra.mxu0 %v1635
    %v1899 = vpop.f32.mrf.mxu0
    %v1900 = vadd.f32 %v1658, %v1899
    %v1901 = vpop.f32.mrf.mxu0
    %v1902 = vadd.f32 %v1658, %v1901
    %1903 = vmatmul.bf16.gmra.mxu0 %v1636
    %v1904 = vpop.f32.mrf.mxu0
    %v1905 = vadd.f32 %v1658, %v1904
    %v1906 = vpop.f32.mrf.mxu0
    %v1907 = vadd.f32 %v1658, %v1906
    %1908 = vmatmul.bf16.gmra.mxu0 %v1637
    %v1909 = vpop.f32.mrf.mxu0
    %v1910 = vadd.f32 %v1658, %v1909
    %v1911 = vpop.f32.mrf.mxu0
    %v1912 = vadd.f32 %v1658, %v1911
    %1913 = vmatmul.bf16.gmra.mxu0 %v1638
    %v1914 = vpop.f32.mrf.mxu0
    %v1915 = vadd.f32 %v1658, %v1914
    %v1916 = vpop.f32.mrf.mxu0
    %v1917 = vadd.f32 %v1658, %v1916
    %1918 = vdwg.mxu0
    %v1919 = vmax.f32 %v1751, 0.0
    %v1920 = vmax.f32 %v1840, 0.0
    %v1921 = vmax.f32 %v1753, 0.0
    %v1922 = vmax.f32 %v1842, 0.0
    %v1923 = vmax.f32 %v1756, 0.0
    %v1924 = vmax.f32 %v1845, 0.0
    %v1925 = vmax.f32 %v1758, 0.0
    %v1926 = vmax.f32 %v1847, 0.0
    %v1927 = vmax.f32 %v1761, 0.0
    %v1928 = vmax.f32 %v1850, 0.0
    %v1929 = vmax.f32 %v1763, 0.0
    %v1930 = vmax.f32 %v1852, 0.0
    %v1931 = vmax.f32 %v1766, 0.0
    %v1932 = vmax.f32 %v1855, 0.0
    %v1933 = vmax.f32 %v1768, 0.0
    %v1934 = vmax.f32 %v1857, 0.0
    %v1935 = vmax.f32 %v1771, 0.0
    %v1936 = vmax.f32 %v1860, 0.0
    %v1937 = vmax.f32 %v1773, 0.0
    %v1938 = vmax.f32 %v1862, 0.0
    %v1939 = vmax.f32 %v1776, 0.0
    %v1940 = vmax.f32 %v1865, 0.0
    %v1941 = vmax.f32 %v1778, 0.0
    %v1942 = vmax.f32 %v1867, 0.0
    %v1943 = vmax.f32 %v1781, 0.0
    %v1944 = vmax.f32 %v1870, 0.0
    %v1945 = vmax.f32 %v1783, 0.0
    %v1946 = vmax.f32 %v1872, 0.0
    %v1947 = vmax.f32 %v1786, 0.0
    %v1948 = vmax.f32 %v1875, 0.0
    %v1949 = vmax.f32 %v1788, 0.0
    %v1950 = vmax.f32 %v1877, 0.0
    %v1951 = vmax.f32 %v1791, 0.0
    %v1952 = vmax.f32 %v1880, 0.0
    %v1953 = vmax.f32 %v1793, 0.0
    %v1954 = vmax.f32 %v1882, 0.0
    %v1955 = vmax.f32 %v1796, 0.0
    %v1956 = vmax.f32 %v1885, 0.0
    %v1957 = vmax.f32 %v1798, 0.0
    %v1958 = vmax.f32 %v1887, 0.0
    %v1959 = vmax.f32 %v1801, 0.0
    %v1960 = vmax.f32 %v1890, 0.0
    %v1961 = vmax.f32 %v1803, 0.0
    %v1962 = vmax.f32 %v1892, 0.0
    %v1963 = vmax.f32 %v1806, 0.0
    %v1964 = vmax.f32 %v1895, 0.0
    %v1965 = vmax.f32 %v1808, 0.0
    %v1966 = vmax.f32 %v1897, 0.0
    %v1967 = vmax.f32 %v1811, 0.0
    %v1968 = vmax.f32 %v1900, 0.0
    %v1969 = vmax.f32 %v1813, 0.0
    %v1970 = vmax.f32 %v1902, 0.0
    %v1971 = vmax.f32 %v1816, 0.0
    %v1972 = vmax.f32 %v1905, 0.0
    %v1973 = vmax.f32 %v1818, 0.0
    %v1974 = vmax.f32 %v1907, 0.0
    %v1975 = vmax.f32 %v1821, 0.0
    %v1976 = vmax.f32 %v1910, 0.0
    %v1977 = vmax.f32 %v1823, 0.0
    %v1978 = vmax.f32 %v1912, 0.0
    %v1979 = vmax.f32 %v1826, 0.0
    %v1980 = vmax.f32 %v1915, 0.0
    %v1981 = vmax.f32 %v1828, 0.0
    %v1982 = vmax.f32 %v1917, 0.0
    %v1983 = vpack.c.bf16 %v1920, %v1919
    %v1984 = vpack.c.bf16 %v1922, %v1921
    %v1985 = vpack.c.bf16 %v1924, %v1923
    %v1986 = vpack.c.bf16 %v1926, %v1925
    %v1987 = vpack.c.bf16 %v1928, %v1927
    %v1988 = vpack.c.bf16 %v1930, %v1929
    %v1989 = vpack.c.bf16 %v1932, %v1931
    %v1990 = vpack.c.bf16 %v1934, %v1933
    %v1991 = vpack.c.bf16 %v1936, %v1935
    %v1992 = vpack.c.bf16 %v1938, %v1937
    %v1993 = vpack.c.bf16 %v1940, %v1939
    %v1994 = vpack.c.bf16 %v1942, %v1941
    %v1995 = vpack.c.bf16 %v1944, %v1943
    %v1996 = vpack.c.bf16 %v1946, %v1945
    %v1997 = vpack.c.bf16 %v1948, %v1947
    %v1998 = vpack.c.bf16 %v1950, %v1949
    %v1999 = vpack.c.bf16 %v1952, %v1951
    %v2000 = vpack.c.bf16 %v1954, %v1953
    %v2001 = vpack.c.bf16 %v1956, %v1955
    %v2002 = vpack.c.bf16 %v1958, %v1957
    %v2003 = vpack.c.bf16 %v1960, %v1959
    %v2004 = vpack.c.bf16 %v1962, %v1961
    %v2005 = vpack.c.bf16 %v1964, %v1963
    %v2006 = vpack.c.bf16 %v1966, %v1965
    %v2007 = vpack.c.bf16 %v1968, %v1967
    %v2008 = vpack.c.bf16 %v1970, %v1969
    %v2009 = vpack.c.bf16 %v1972, %v1971
    %v2010 = vpack.c.bf16 %v1974, %v1973
    %v2011 = vpack.c.bf16 %v1976, %v1975
    %v2012 = vpack.c.bf16 %v1978, %v1977
    %v2013 = vpack.c.bf16 %v1980, %v1979
    %v2014 = vpack.c.bf16 %v1982, %v1981
    %v2015 = vunpack.c.l.bf16 %v1983
    %v2016 = vunpack.c.h.bf16 %v1983
    %v2017 = vunpack.c.l.bf16 %v1984
    %v2018 = vunpack.c.h.bf16 %v1984
    %v2019 = vunpack.c.l.bf16 %v1985
    %v2020 = vunpack.c.h.bf16 %v1985
    %v2021 = vunpack.c.l.bf16 %v1986
    %v2022 = vunpack.c.h.bf16 %v1986
    %v2023 = vunpack.c.l.bf16 %v1987
    %v2024 = vunpack.c.h.bf16 %v1987
    %v2025 = vunpack.c.l.bf16 %v1988
    %v2026 = vunpack.c.h.bf16 %v1988
    %v2027 = vunpack.c.l.bf16 %v1989
    %v2028 = vunpack.c.h.bf16 %v1989
    %v2029 = vunpack.c.l.bf16 %v1990
    %v2030 = vunpack.c.h.bf16 %v1990
    %v2031 = vunpack.c.l.bf16 %v1991
    %v2032 = vunpack.c.h.bf16 %v1991
    %v2033 = vunpack.c.l.bf16 %v1992
    %v2034 = vunpack.c.h.bf16 %v1992
    %v2035 = vunpack.c.l.bf16 %v1993
    %v2036 = vunpack.c.h.bf16 %v1993
    %v2037 = vunpack.c.l.bf16 %v1994
    %v2038 = vunpack.c.h.bf16 %v1994
    %v2039 = vunpack.c.l.bf16 %v1995
    %v2040 = vunpack.c.h.bf16 %v1995
    %v2041 = vunpack.c.l.bf16 %v1996
    %v2042 = vunpack.c.h.bf16 %v1996
    %v2043 = vunpack.c.l.bf16 %v1997
    %v2044 = vunpack.c.h.bf16 %v1997
    %v2045 = vunpack.c.l.bf16 %v1998
    %v2046 = vunpack.c.h.bf16 %v1998
    %v2047 = vunpack.c.l.bf16 %v1999
    %v2048 = vunpack.c.h.bf16 %v1999
    %v2049 = vunpack.c.l.bf16 %v2000
    %v2050 = vunpack.c.h.bf16 %v2000
    %v2051 = vunpack.c.l.bf16 %v2001
    %v2052 = vunpack.c.h.bf16 %v2001
    %v2053 = vunpack.c.l.bf16 %v2002
    %v2054 = vunpack.c.h.bf16 %v2002
    %v2055 = vunpack.c.l.bf16 %v2003
    %v2056 = vunpack.c.h.bf16 %v2003
    %v2057 = vunpack.c.l.bf16 %v2004
    %v2058 = vunpack.c.h.bf16 %v2004
    %v2059 = vunpack.c.l.bf16 %v2005
    %v2060 = vunpack.c.h.bf16 %v2005
    %v2061 = vunpack.c.l.bf16 %v2006
    %v2062 = vunpack.c.h.bf16 %v2006
    %v2063 = vunpack.c.l.bf16 %v2007
    %v2064 = vunpack.c.h.bf16 %v2007
    %v2065 = vunpack.c.l.bf16 %v2008
    %v2066 = vunpack.c.h.bf16 %v2008
    %v2067 = vunpack.c.l.bf16 %v2009
    %v2068 = vunpack.c.h.bf16 %v2009
    %v2069 = vunpack.c.l.bf16 %v2010
    %v2070 = vunpack.c.h.bf16 %v2010
    %v2071 = vunpack.c.l.bf16 %v2011
    %v2072 = vunpack.c.h.bf16 %v2011
    %v2073 = vunpack.c.l.bf16 %v2012
    %v2074 = vunpack.c.h.bf16 %v2012
    %v2075 = vunpack.c.l.bf16 %v2013
    %v2076 = vunpack.c.h.bf16 %v2013
    %v2077 = vunpack.c.l.bf16 %v2014
    %v2078 = vunpack.c.h.bf16 %v2014
    %v2079 = vld [vmem:[%s9] sm:$0x77]
    %v2081 = vperm.slane %v2079, 0
    %v2082 = vperm.slane %v2079, 4
    %v2085 = vperm.slane %v2081, 0
    %v2086 = vperm.slane %v2082, 0
    %v2087 = vmul.f32 %v2015, %v2085
    %v2088 = vmul.f32 %v2016, %v2086
    %v2089 = vmul.f32 %v2017, %v2085
    %v2090 = vmul.f32 %v2018, %v2086
    %v2091 = vmul.f32 %v2019, %v2085
    %v2092 = vmul.f32 %v2020, %v2086
    %v2093 = vmul.f32 %v2021, %v2085
    %v2094 = vmul.f32 %v2022, %v2086
    %v2095 = vmul.f32 %v2023, %v2085
    %v2096 = vmul.f32 %v2024, %v2086
    %v2097 = vmul.f32 %v2025, %v2085
    %v2098 = vmul.f32 %v2026, %v2086
    %v2099 = vmul.f32 %v2027, %v2085
    %v2100 = vmul.f32 %v2028, %v2086
    %v2101 = vmul.f32 %v2029, %v2085
    %v2102 = vmul.f32 %v2030, %v2086
    %v2103 = vmul.f32 %v2031, %v2085
    %v2104 = vmul.f32 %v2032, %v2086
    %v2105 = vmul.f32 %v2033, %v2085
    %v2106 = vmul.f32 %v2034, %v2086
    %v2107 = vmul.f32 %v2035, %v2085
    %v2108 = vmul.f32 %v2036, %v2086
    %v2109 = vmul.f32 %v2037, %v2085
    %v2110 = vmul.f32 %v2038, %v2086
    %v2111 = vmul.f32 %v2039, %v2085
    %v2112 = vmul.f32 %v2040, %v2086
    %v2113 = vmul.f32 %v2041, %v2085
    %v2114 = vmul.f32 %v2042, %v2086
    %v2115 = vmul.f32 %v2043, %v2085
    %v2116 = vmul.f32 %v2044, %v2086
    %v2117 = vmul.f32 %v2045, %v2085
    %v2118 = vmul.f32 %v2046, %v2086
    %v2119 = vmul.f32 %v2047, %v2085
    %v2120 = vmul.f32 %v2048, %v2086
    %v2121 = vmul.f32 %v2049, %v2085
    %v2122 = vmul.f32 %v2050, %v2086
    %v2123 = vmul.f32 %v2051, %v2085
    %v2124 = vmul.f32 %v2052, %v2086
    %v2125 = vmul.f32 %v2053, %v2085
    %v2126 = vmul.f32 %v2054, %v2086
    %v2127 = vmul.f32 %v2055, %v2085
    %v2128 = vmul.f32 %v2056, %v2086
    %v2129 = vmul.f32 %v2057, %v2085
    %v2130 = vmul.f32 %v2058, %v2086
    %v2131 = vmul.f32 %v2059, %v2085
    %v2132 = vmul.f32 %v2060, %v2086
    %v2133 = vmul.f32 %v2061, %v2085
    %v2134 = vmul.f32 %v2062, %v2086
    %v2135 = vmul.f32 %v2063, %v2085
    %v2136 = vmul.f32 %v2064, %v2086
    %v2137 = vmul.f32 %v2065, %v2085
    %v2138 = vmul.f32 %v2066, %v2086
    %v2139 = vmul.f32 %v2067, %v2085
    %v2140 = vmul.f32 %v2068, %v2086
    %v2141 = vmul.f32 %v2069, %v2085
    %v2142 = vmul.f32 %v2070, %v2086
    %v2143 = vmul.f32 %v2071, %v2085
    %v2144 = vmul.f32 %v2072, %v2086
    %v2145 = vmul.f32 %v2073, %v2085
    %v2146 = vmul.f32 %v2074, %v2086
    %v2147 = vmul.f32 %v2075, %v2085
    %v2148 = vmul.f32 %v2076, %v2086
    %v2149 = vmul.f32 %v2077, %v2085
    %v2150 = vmul.f32 %v2078, %v2086
    %v2151 = vadd.f32 %v2087, %v2088
    %2152 = vadd.xlane.f32.xlu0 %v2151
    %v2153 = vpop.xlane.xlu0 %2152
    %v2154 = vadd.f32 %v2089, %v2090
    %2155 = vadd.xlane.f32.xlu0 %v2154
    %v2156 = vpop.xlane.xlu0 %2155
    %v2157 = vadd.f32 %v2091, %v2092
    %2158 = vadd.xlane.f32.xlu0 %v2157
    %v2159 = vpop.xlane.xlu0 %2158
    %v2160 = vadd.f32 %v2093, %v2094
    %2161 = vadd.xlane.f32.xlu0 %v2160
    %v2162 = vpop.xlane.xlu0 %2161
    %v2163 = vadd.f32 %v2095, %v2096
    %2164 = vadd.xlane.f32.xlu0 %v2163
    %v2165 = vpop.xlane.xlu0 %2164
    %v2166 = vadd.f32 %v2097, %v2098
    %2167 = vadd.xlane.f32.xlu0 %v2166
    %v2168 = vpop.xlane.xlu0 %2167
    %v2169 = vadd.f32 %v2099, %v2100
    %2170 = vadd.xlane.f32.xlu0 %v2169
    %v2171 = vpop.xlane.xlu0 %2170
    %v2172 = vadd.f32 %v2101, %v2102
    %2173 = vadd.xlane.f32.xlu0 %v2172
    %v2174 = vpop.xlane.xlu0 %2173
    %v2175 = vadd.f32 %v2103, %v2104
    %2176 = vadd.xlane.f32.xlu0 %v2175
    %v2177 = vpop.xlane.xlu0 %2176
    %v2178 = vadd.f32 %v2105, %v2106
    %2179 = vadd.xlane.f32.xlu0 %v2178
    %v2180 = vpop.xlane.xlu0 %2179
    %v2181 = vadd.f32 %v2107, %v2108
    %2182 = vadd.xlane.f32.xlu0 %v2181
    %v2183 = vpop.xlane.xlu0 %2182
    %v2184 = vadd.f32 %v2109, %v2110
    %2185 = vadd.xlane.f32.xlu0 %v2184
    %v2186 = vpop.xlane.xlu0 %2185
    %v2187 = vadd.f32 %v2111, %v2112
    %2188 = vadd.xlane.f32.xlu0 %v2187
    %v2189 = vpop.xlane.xlu0 %2188
    %v2190 = vadd.f32 %v2113, %v2114
    %2191 = vadd.xlane.f32.xlu0 %v2190
    %v2192 = vpop.xlane.xlu0 %2191
    %v2193 = vadd.f32 %v2115, %v2116
    %2194 = vadd.xlane.f32.xlu0 %v2193
    %v2195 = vpop.xlane.xlu0 %2194
    %v2196 = vadd.f32 %v2117, %v2118
    %2197 = vadd.xlane.f32.xlu0 %v2196
    %v2198 = vpop.xlane.xlu0 %2197
    %v2199 = vadd.f32 %v2119, %v2120
    %2200 = vadd.xlane.f32.xlu0 %v2199
    %v2201 = vpop.xlane.xlu0 %2200
    %v2202 = vadd.f32 %v2121, %v2122
    %2203 = vadd.xlane.f32.xlu0 %v2202
    %v2204 = vpop.xlane.xlu0 %2203
    %v2205 = vadd.f32 %v2123, %v2124
    %2206 = vadd.xlane.f32.xlu0 %v2205
    %v2207 = vpop.xlane.xlu0 %2206
    %v2208 = vadd.f32 %v2125, %v2126
    %2209 = vadd.xlane.f32.xlu0 %v2208
    %v2210 = vpop.xlane.xlu0 %2209
    %v2211 = vadd.f32 %v2127, %v2128
    %2212 = vadd.xlane.f32.xlu0 %v2211
    %v2213 = vpop.xlane.xlu0 %2212
    %v2214 = vadd.f32 %v2129, %v2130
    %2215 = vadd.xlane.f32.xlu0 %v2214
    %v2216 = vpop.xlane.xlu0 %2215
    %v2217 = vadd.f32 %v2131, %v2132
    %2218 = vadd.xlane.f32.xlu0 %v2217
    %v2219 = vpop.xlane.xlu0 %2218
    %v2220 = vadd.f32 %v2133, %v2134
    %2221 = vadd.xlane.f32.xlu0 %v2220
    %v2222 = vpop.xlane.xlu0 %2221
    %v2223 = vadd.f32 %v2135, %v2136
    %2224 = vadd.xlane.f32.xlu0 %v2223
    %v2225 = vpop.xlane.xlu0 %2224
    %v2226 = vadd.f32 %v2137, %v2138
    %2227 = vadd.xlane.f32.xlu0 %v2226
    %v2228 = vpop.xlane.xlu0 %2227
    %v2229 = vadd.f32 %v2139, %v2140
    %2230 = vadd.xlane.f32.xlu0 %v2229
    %v2231 = vpop.xlane.xlu0 %2230
    %v2232 = vadd.f32 %v2141, %v2142
    %2233 = vadd.xlane.f32.xlu0 %v2232
    %v2234 = vpop.xlane.xlu0 %2233
    %v2235 = vadd.f32 %v2143, %v2144
    %2236 = vadd.xlane.f32.xlu0 %v2235
    %v2237 = vpop.xlane.xlu0 %2236
    %v2238 = vadd.f32 %v2145, %v2146
    %2239 = vadd.xlane.f32.xlu0 %v2238
    %v2240 = vpop.xlane.xlu0 %2239
    %v2241 = vadd.f32 %v2147, %v2148
    %2242 = vadd.xlane.f32.xlu0 %v2241
    %v2243 = vpop.xlane.xlu0 %2242
    %v2244 = vadd.f32 %v2149, %v2150
    %2245 = vadd.xlane.f32.xlu0 %v2244
    %v2246 = vpop.xlane.xlu0 %2245
    %v2247 = vperm.slane %v2079, 1
    %v2248 = vperm.slane %v2079, 5
    %v2251 = vperm.slane %v2247, 1
    %v2252 = vperm.slane %v2248, 1
    %v2253 = vmul.f32 %v2015, %v2251
    %v2254 = vmul.f32 %v2016, %v2252
    %v2255 = vmul.f32 %v2017, %v2251
    %v2256 = vmul.f32 %v2018, %v2252
    %v2257 = vmul.f32 %v2019, %v2251
    %v2258 = vmul.f32 %v2020, %v2252
    %v2259 = vmul.f32 %v2021, %v2251
    %v2260 = vmul.f32 %v2022, %v2252
    %v2261 = vmul.f32 %v2023, %v2251
    %v2262 = vmul.f32 %v2024, %v2252
    %v2263 = vmul.f32 %v2025, %v2251
    %v2264 = vmul.f32 %v2026, %v2252
    %v2265 = vmul.f32 %v2027, %v2251
    %v2266 = vmul.f32 %v2028, %v2252
    %v2267 = vmul.f32 %v2029, %v2251
    %v2268 = vmul.f32 %v2030, %v2252
    %v2269 = vmul.f32 %v2031, %v2251
    %v2270 = vmul.f32 %v2032, %v2252
    %v2271 = vmul.f32 %v2033, %v2251
    %v2272 = vmul.f32 %v2034, %v2252
    %v2273 = vmul.f32 %v2035, %v2251
    %v2274 = vmul.f32 %v2036, %v2252
    %v2275 = vmul.f32 %v2037, %v2251
    %v2276 = vmul.f32 %v2038, %v2252
    %v2277 = vmul.f32 %v2039, %v2251
    %v2278 = vmul.f32 %v2040, %v2252
    %v2279 = vmul.f32 %v2041, %v2251
    %v2280 = vmul.f32 %v2042, %v2252
    %v2281 = vmul.f32 %v2043, %v2251
    %v2282 = vmul.f32 %v2044, %v2252
    %v2283 = vmul.f32 %v2045, %v2251
    %v2284 = vmul.f32 %v2046, %v2252
    %v2285 = vmul.f32 %v2047, %v2251
    %v2286 = vmul.f32 %v2048, %v2252
    %v2287 = vmul.f32 %v2049, %v2251
    %v2288 = vmul.f32 %v2050, %v2252
    %v2289 = vmul.f32 %v2051, %v2251
    %v2290 = vmul.f32 %v2052, %v2252
    %v2291 = vmul.f32 %v2053, %v2251
    %v2292 = vmul.f32 %v2054, %v2252
    %v2293 = vmul.f32 %v2055, %v2251
    %v2294 = vmul.f32 %v2056, %v2252
    %v2295 = vmul.f32 %v2057, %v2251
    %v2296 = vmul.f32 %v2058, %v2252
    %v2297 = vmul.f32 %v2059, %v2251
    %v2298 = vmul.f32 %v2060, %v2252
    %v2299 = vmul.f32 %v2061, %v2251
    %v2300 = vmul.f32 %v2062, %v2252
    %v2301 = vmul.f32 %v2063, %v2251
    %v2302 = vmul.f32 %v2064, %v2252
    %v2303 = vmul.f32 %v2065, %v2251
    %v2304 = vmul.f32 %v2066, %v2252
    %v2305 = vmul.f32 %v2067, %v2251
    %v2306 = vmul.f32 %v2068, %v2252
    %v2307 = vmul.f32 %v2069, %v2251
    %v2308 = vmul.f32 %v2070, %v2252
    %v2309 = vmul.f32 %v2071, %v2251
    %v2310 = vmul.f32 %v2072, %v2252
    %v2311 = vmul.f32 %v2073, %v2251
    %v2312 = vmul.f32 %v2074, %v2252
    %v2313 = vmul.f32 %v2075, %v2251
    %v2314 = vmul.f32 %v2076, %v2252
    %v2315 = vmul.f32 %v2077, %v2251
    %v2316 = vmul.f32 %v2078, %v2252
    %v2317 = vadd.f32 %v2253, %v2254
    %2318 = vadd.xlane.f32.xlu0 %v2317
    %v2319 = vpop.xlane.xlu0 %2318
    %v2320 = vadd.f32 %v2255, %v2256
    %2321 = vadd.xlane.f32.xlu0 %v2320
    %v2322 = vpop.xlane.xlu0 %2321
    %v2323 = vadd.f32 %v2257, %v2258
    %2324 = vadd.xlane.f32.xlu0 %v2323
    %v2325 = vpop.xlane.xlu0 %2324
    %v2326 = vadd.f32 %v2259, %v2260
    %2327 = vadd.xlane.f32.xlu0 %v2326
    %v2328 = vpop.xlane.xlu0 %2327
    %v2329 = vadd.f32 %v2261, %v2262
    %2330 = vadd.xlane.f32.xlu0 %v2329
    %v2331 = vpop.xlane.xlu0 %2330
    %v2332 = vadd.f32 %v2263, %v2264
    %2333 = vadd.xlane.f32.xlu0 %v2332
    %v2334 = vpop.xlane.xlu0 %2333
    %v2335 = vadd.f32 %v2265, %v2266
    %2336 = vadd.xlane.f32.xlu0 %v2335
    %v2337 = vpop.xlane.xlu0 %2336
    %v2338 = vadd.f32 %v2267, %v2268
    %2339 = vadd.xlane.f32.xlu0 %v2338
    %v2340 = vpop.xlane.xlu0 %2339
    %v2341 = vadd.f32 %v2269, %v2270
    %2342 = vadd.xlane.f32.xlu0 %v2341
    %v2343 = vpop.xlane.xlu0 %2342
    %v2344 = vadd.f32 %v2271, %v2272
    %2345 = vadd.xlane.f32.xlu0 %v2344
    %v2346 = vpop.xlane.xlu0 %2345
    %v2347 = vadd.f32 %v2273, %v2274
    %2348 = vadd.xlane.f32.xlu0 %v2347
    %v2349 = vpop.xlane.xlu0 %2348
    %v2350 = vadd.f32 %v2275, %v2276
    %2351 = vadd.xlane.f32.xlu0 %v2350
    %v2352 = vpop.xlane.xlu0 %2351
    %v2353 = vadd.f32 %v2277, %v2278
    %2354 = vadd.xlane.f32.xlu0 %v2353
    %v2355 = vpop.xlane.xlu0 %2354
    %v2356 = vadd.f32 %v2279, %v2280
    %2357 = vadd.xlane.f32.xlu0 %v2356
    %v2358 = vpop.xlane.xlu0 %2357
    %v2359 = vadd.f32 %v2281, %v2282
    %2360 = vadd.xlane.f32.xlu0 %v2359
    %v2361 = vpop.xlane.xlu0 %2360
    %v2362 = vadd.f32 %v2283, %v2284
    %2363 = vadd.xlane.f32.xlu0 %v2362
    %v2364 = vpop.xlane.xlu0 %2363
    %v2365 = vadd.f32 %v2285, %v2286
    %2366 = vadd.xlane.f32.xlu0 %v2365
    %v2367 = vpop.xlane.xlu0 %2366
    %v2368 = vadd.f32 %v2287, %v2288
    %2369 = vadd.xlane.f32.xlu0 %v2368
    %v2370 = vpop.xlane.xlu0 %2369
    %v2371 = vadd.f32 %v2289, %v2290
    %2372 = vadd.xlane.f32.xlu0 %v2371
    %v2373 = vpop.xlane.xlu0 %2372
    %v2374 = vadd.f32 %v2291, %v2292
    %2375 = vadd.xlane.f32.xlu0 %v2374
    %v2376 = vpop.xlane.xlu0 %2375
    %v2377 = vadd.f32 %v2293, %v2294
    %2378 = vadd.xlane.f32.xlu0 %v2377
    %v2379 = vpop.xlane.xlu0 %2378
    %v2380 = vadd.f32 %v2295, %v2296
    %2381 = vadd.xlane.f32.xlu0 %v2380
    %v2382 = vpop.xlane.xlu0 %2381
    %v2383 = vadd.f32 %v2297, %v2298
    %2384 = vadd.xlane.f32.xlu0 %v2383
    %v2385 = vpop.xlane.xlu0 %2384
    %v2386 = vadd.f32 %v2299, %v2300
    %2387 = vadd.xlane.f32.xlu0 %v2386
    %v2388 = vpop.xlane.xlu0 %2387
    %v2389 = vadd.f32 %v2301, %v2302
    %2390 = vadd.xlane.f32.xlu0 %v2389
    %v2391 = vpop.xlane.xlu0 %2390
    %v2392 = vadd.f32 %v2303, %v2304
    %2393 = vadd.xlane.f32.xlu0 %v2392
    %v2394 = vpop.xlane.xlu0 %2393
    %v2395 = vadd.f32 %v2305, %v2306
    %2396 = vadd.xlane.f32.xlu0 %v2395
    %v2397 = vpop.xlane.xlu0 %2396
    %v2398 = vadd.f32 %v2307, %v2308
    %2399 = vadd.xlane.f32.xlu0 %v2398
    %v2400 = vpop.xlane.xlu0 %2399
    %v2401 = vadd.f32 %v2309, %v2310
    %2402 = vadd.xlane.f32.xlu0 %v2401
    %v2403 = vpop.xlane.xlu0 %2402
    %v2404 = vadd.f32 %v2311, %v2312
    %2405 = vadd.xlane.f32.xlu0 %v2404
    %v2406 = vpop.xlane.xlu0 %2405
    %v2407 = vadd.f32 %v2313, %v2314
    %2408 = vadd.xlane.f32.xlu0 %v2407
    %v2409 = vpop.xlane.xlu0 %2408
    %v2410 = vadd.f32 %v2315, %v2316
    %2411 = vadd.xlane.f32.xlu0 %v2410
    %v2412 = vpop.xlane.xlu0 %2411
    %v2413 = vperm.slane %v2079, 2
    %v2414 = vperm.slane %v2079, 6
    %v2417 = vperm.slane %v2413, 2
    %v2418 = vperm.slane %v2414, 2
    %v2419 = vmul.f32 %v2015, %v2417
    %v2420 = vmul.f32 %v2016, %v2418
    %v2421 = vmul.f32 %v2017, %v2417
    %v2422 = vmul.f32 %v2018, %v2418
    %v2423 = vmul.f32 %v2019, %v2417
    %v2424 = vmul.f32 %v2020, %v2418
    %v2425 = vmul.f32 %v2021, %v2417
    %v2426 = vmul.f32 %v2022, %v2418
    %v2427 = vmul.f32 %v2023, %v2417
    %v2428 = vmul.f32 %v2024, %v2418
    %v2429 = vmul.f32 %v2025, %v2417
    %v2430 = vmul.f32 %v2026, %v2418
    %v2431 = vmul.f32 %v2027, %v2417
    %v2432 = vmul.f32 %v2028, %v2418
    %v2433 = vmul.f32 %v2029, %v2417
    %v2434 = vmul.f32 %v2030, %v2418
    %v2435 = vmul.f32 %v2031, %v2417
    %v2436 = vmul.f32 %v2032, %v2418
    %v2437 = vmul.f32 %v2033, %v2417
    %v2438 = vmul.f32 %v2034, %v2418
    %v2439 = vmul.f32 %v2035, %v2417
    %v2440 = vmul.f32 %v2036, %v2418
    %v2441 = vmul.f32 %v2037, %v2417
    %v2442 = vmul.f32 %v2038, %v2418
    %v2443 = vmul.f32 %v2039, %v2417
    %v2444 = vmul.f32 %v2040, %v2418
    %v2445 = vmul.f32 %v2041, %v2417
    %v2446 = vmul.f32 %v2042, %v2418
    %v2447 = vmul.f32 %v2043, %v2417
    %v2448 = vmul.f32 %v2044, %v2418
    %v2449 = vmul.f32 %v2045, %v2417
    %v2450 = vmul.f32 %v2046, %v2418
    %v2451 = vmul.f32 %v2047, %v2417
    %v2452 = vmul.f32 %v2048, %v2418
    %v2453 = vmul.f32 %v2049, %v2417
    %v2454 = vmul.f32 %v2050, %v2418
    %v2455 = vmul.f32 %v2051, %v2417
    %v2456 = vmul.f32 %v2052, %v2418
    %v2457 = vmul.f32 %v2053, %v2417
    %v2458 = vmul.f32 %v2054, %v2418
    %v2459 = vmul.f32 %v2055, %v2417
    %v2460 = vmul.f32 %v2056, %v2418
    %v2461 = vmul.f32 %v2057, %v2417
    %v2462 = vmul.f32 %v2058, %v2418
    %v2463 = vmul.f32 %v2059, %v2417
    %v2464 = vmul.f32 %v2060, %v2418
    %v2465 = vmul.f32 %v2061, %v2417
    %v2466 = vmul.f32 %v2062, %v2418
    %v2467 = vmul.f32 %v2063, %v2417
    %v2468 = vmul.f32 %v2064, %v2418
    %v2469 = vmul.f32 %v2065, %v2417
    %v2470 = vmul.f32 %v2066, %v2418
    %v2471 = vmul.f32 %v2067, %v2417
    %v2472 = vmul.f32 %v2068, %v2418
    %v2473 = vmul.f32 %v2069, %v2417
    %v2474 = vmul.f32 %v2070, %v2418
    %v2475 = vmul.f32 %v2071, %v2417
    %v2476 = vmul.f32 %v2072, %v2418
    %v2477 = vmul.f32 %v2073, %v2417
    %v2478 = vmul.f32 %v2074, %v2418
    %v2479 = vmul.f32 %v2075, %v2417
    %v2480 = vmul.f32 %v2076, %v2418
    %v2481 = vmul.f32 %v2077, %v2417
    %v2482 = vmul.f32 %v2078, %v2418
    %v2483 = vadd.f32 %v2419, %v2420
    %2484 = vadd.xlane.f32.xlu0 %v2483
    %v2485 = vpop.xlane.xlu0 %2484
    %v2486 = vadd.f32 %v2421, %v2422
    %2487 = vadd.xlane.f32.xlu0 %v2486
    %v2488 = vpop.xlane.xlu0 %2487
    %v2489 = vadd.f32 %v2423, %v2424
    %2490 = vadd.xlane.f32.xlu0 %v2489
    %v2491 = vpop.xlane.xlu0 %2490
    %v2492 = vadd.f32 %v2425, %v2426
    %2493 = vadd.xlane.f32.xlu0 %v2492
    %v2494 = vpop.xlane.xlu0 %2493
    %v2495 = vadd.f32 %v2427, %v2428
    %2496 = vadd.xlane.f32.xlu0 %v2495
    %v2497 = vpop.xlane.xlu0 %2496
    %v2498 = vadd.f32 %v2429, %v2430
    %2499 = vadd.xlane.f32.xlu0 %v2498
    %v2500 = vpop.xlane.xlu0 %2499
    %v2501 = vadd.f32 %v2431, %v2432
    %2502 = vadd.xlane.f32.xlu0 %v2501
    %v2503 = vpop.xlane.xlu0 %2502
    %v2504 = vadd.f32 %v2433, %v2434
    %2505 = vadd.xlane.f32.xlu0 %v2504
    %v2506 = vpop.xlane.xlu0 %2505
    %v2507 = vadd.f32 %v2435, %v2436
    %2508 = vadd.xlane.f32.xlu0 %v2507
    %v2509 = vpop.xlane.xlu0 %2508
    %v2510 = vadd.f32 %v2437, %v2438
    %2511 = vadd.xlane.f32.xlu0 %v2510
    %v2512 = vpop.xlane.xlu0 %2511
    %v2513 = vadd.f32 %v2439, %v2440
    %2514 = vadd.xlane.f32.xlu0 %v2513
    %v2515 = vpop.xlane.xlu0 %2514
    %v2516 = vadd.f32 %v2441, %v2442
    %2517 = vadd.xlane.f32.xlu0 %v2516
    %v2518 = vpop.xlane.xlu0 %2517
    %v2519 = vadd.f32 %v2443, %v2444
    %2520 = vadd.xlane.f32.xlu0 %v2519
    %v2521 = vpop.xlane.xlu0 %2520
    %v2522 = vadd.f32 %v2445, %v2446
    %2523 = vadd.xlane.f32.xlu0 %v2522
    %v2524 = vpop.xlane.xlu0 %2523
    %v2525 = vadd.f32 %v2447, %v2448
    %2526 = vadd.xlane.f32.xlu0 %v2525
    %v2527 = vpop.xlane.xlu0 %2526
    %v2528 = vadd.f32 %v2449, %v2450
    %2529 = vadd.xlane.f32.xlu0 %v2528
    %v2530 = vpop.xlane.xlu0 %2529
    %v2531 = vadd.f32 %v2451, %v2452
    %2532 = vadd.xlane.f32.xlu0 %v2531
    %v2533 = vpop.xlane.xlu0 %2532
    %v2534 = vadd.f32 %v2453, %v2454
    %2535 = vadd.xlane.f32.xlu0 %v2534
    %v2536 = vpop.xlane.xlu0 %2535
    %v2537 = vadd.f32 %v2455, %v2456
    %2538 = vadd.xlane.f32.xlu0 %v2537
    %v2539 = vpop.xlane.xlu0 %2538
    %v2540 = vadd.f32 %v2457, %v2458
    %2541 = vadd.xlane.f32.xlu0 %v2540
    %v2542 = vpop.xlane.xlu0 %2541
    %v2543 = vadd.f32 %v2459, %v2460
    %2544 = vadd.xlane.f32.xlu0 %v2543
    %v2545 = vpop.xlane.xlu0 %2544
    %v2546 = vadd.f32 %v2461, %v2462
    %2547 = vadd.xlane.f32.xlu0 %v2546
    %v2548 = vpop.xlane.xlu0 %2547
    %v2549 = vadd.f32 %v2463, %v2464
    %2550 = vadd.xlane.f32.xlu0 %v2549
    %v2551 = vpop.xlane.xlu0 %2550
    %v2552 = vadd.f32 %v2465, %v2466
    %2553 = vadd.xlane.f32.xlu0 %v2552
    %v2554 = vpop.xlane.xlu0 %2553
    %v2555 = vadd.f32 %v2467, %v2468
    %2556 = vadd.xlane.f32.xlu0 %v2555
    %v2557 = vpop.xlane.xlu0 %2556
    %v2558 = vadd.f32 %v2469, %v2470
    %2559 = vadd.xlane.f32.xlu0 %v2558
    %v2560 = vpop.xlane.xlu0 %2559
    %v2561 = vadd.f32 %v2471, %v2472
    %2562 = vadd.xlane.f32.xlu0 %v2561
    %v2563 = vpop.xlane.xlu0 %2562
    %v2564 = vadd.f32 %v2473, %v2474
    %2565 = vadd.xlane.f32.xlu0 %v2564
    %v2566 = vpop.xlane.xlu0 %2565
    %v2567 = vadd.f32 %v2475, %v2476
    %2568 = vadd.xlane.f32.xlu0 %v2567
    %v2569 = vpop.xlane.xlu0 %2568
    %v2570 = vadd.f32 %v2477, %v2478
    %2571 = vadd.xlane.f32.xlu0 %v2570
    %v2572 = vpop.xlane.xlu0 %2571
    %v2573 = vadd.f32 %v2479, %v2480
    %2574 = vadd.xlane.f32.xlu0 %v2573
    %v2575 = vpop.xlane.xlu0 %2574
    %v2576 = vadd.f32 %v2481, %v2482
    %2577 = vadd.xlane.f32.xlu0 %v2576
    %v2578 = vpop.xlane.xlu0 %2577
    %vm2579 = vcmask 7168
    %v2580 = vsel %vm2579, %v2153, %v2319
    %v2581 = vsel %vm2579, %v2156, %v2322
    %v2582 = vsel %vm2579, %v2159, %v2325
    %v2583 = vsel %vm2579, %v2162, %v2328
    %v2584 = vsel %vm2579, %v2165, %v2331
    %v2585 = vsel %vm2579, %v2168, %v2334
    %v2586 = vsel %vm2579, %v2171, %v2337
    %v2587 = vsel %vm2579, %v2174, %v2340
    %v2588 = vsel %vm2579, %v2177, %v2343
    %v2589 = vsel %vm2579, %v2180, %v2346
    %v2590 = vsel %vm2579, %v2183, %v2349
    %v2591 = vsel %vm2579, %v2186, %v2352
    %v2592 = vsel %vm2579, %v2189, %v2355
    %v2593 = vsel %vm2579, %v2192, %v2358
    %v2594 = vsel %vm2579, %v2195, %v2361
    %v2595 = vsel %vm2579, %v2198, %v2364
    %v2596 = vsel %vm2579, %v2201, %v2367
    %v2597 = vsel %vm2579, %v2204, %v2370
    %v2598 = vsel %vm2579, %v2207, %v2373
    %v2599 = vsel %vm2579, %v2210, %v2376
    %v2600 = vsel %vm2579, %v2213, %v2379
    %v2601 = vsel %vm2579, %v2216, %v2382
    %v2602 = vsel %vm2579, %v2219, %v2385
    %v2603 = vsel %vm2579, %v2222, %v2388
    %v2604 = vsel %vm2579, %v2225, %v2391
    %v2605 = vsel %vm2579, %v2228, %v2394
    %v2606 = vsel %vm2579, %v2231, %v2397
    %v2607 = vsel %vm2579, %v2234, %v2400
    %v2608 = vsel %vm2579, %v2237, %v2403
    %v2609 = vsel %vm2579, %v2240, %v2406
    %v2610 = vsel %vm2579, %v2243, %v2409
    %v2611 = vsel %vm2579, %v2246, %v2412
    %vm2612 = vcmask 15360
    %v2613 = vsel %vm2612, %v2580, %v2485
    %v2614 = vsel %vm2612, %v2581, %v2488
    %v2615 = vsel %vm2612, %v2582, %v2491
    %v2616 = vsel %vm2612, %v2583, %v2494
    %v2617 = vsel %vm2612, %v2584, %v2497
    %v2618 = vsel %vm2612, %v2585, %v2500
    %v2619 = vsel %vm2612, %v2586, %v2503
    %v2620 = vsel %vm2612, %v2587, %v2506
    %v2621 = vsel %vm2612, %v2588, %v2509
    %v2622 = vsel %vm2612, %v2589, %v2512
    %v2623 = vsel %vm2612, %v2590, %v2515
    %v2624 = vsel %vm2612, %v2591, %v2518
    %v2625 = vsel %vm2612, %v2592, %v2521
    %v2626 = vsel %vm2612, %v2593, %v2524
    %v2627 = vsel %vm2612, %v2594, %v2527
    %v2628 = vsel %vm2612, %v2595, %v2530
    %v2629 = vsel %vm2612, %v2596, %v2533
    %v2630 = vsel %vm2612, %v2597, %v2536
    %v2631 = vsel %vm2612, %v2598, %v2539
    %v2632 = vsel %vm2612, %v2599, %v2542
    %v2633 = vsel %vm2612, %v2600, %v2545
    %v2634 = vsel %vm2612, %v2601, %v2548
    %v2635 = vsel %vm2612, %v2602, %v2551
    %v2636 = vsel %vm2612, %v2603, %v2554
    %v2637 = vsel %vm2612, %v2604, %v2557
    %v2638 = vsel %vm2612, %v2605, %v2560
    %v2639 = vsel %vm2612, %v2606, %v2563
    %v2640 = vsel %vm2612, %v2607, %v2566
    %v2641 = vsel %vm2612, %v2608, %v2569
    %v2642 = vsel %vm2612, %v2609, %v2572
    %v2643 = vsel %vm2612, %v2610, %v2575
    %v2644 = vsel %vm2612, %v2611, %v2578
    %v2645 = vld [vmem:[#allocation10] sm:$0x1]
    %v2647 = vperm.slane %v2645, 0
    %v2649 = vadd.f32 %v2613, %v2647
    %v2650 = vadd.f32 %v2614, %v2647
    %v2651 = vadd.f32 %v2615, %v2647
    %v2652 = vadd.f32 %v2616, %v2647
    %v2653 = vadd.f32 %v2617, %v2647
    %v2654 = vadd.f32 %v2618, %v2647
    %v2655 = vadd.f32 %v2619, %v2647
    %v2656 = vadd.f32 %v2620, %v2647
    %v2657 = vadd.f32 %v2621, %v2647
    %v2658 = vadd.f32 %v2622, %v2647
    %v2659 = vadd.f32 %v2623, %v2647
    %v2660 = vadd.f32 %v2624, %v2647
    %v2661 = vadd.f32 %v2625, %v2647
    %v2662 = vadd.f32 %v2626, %v2647
    %v2663 = vadd.f32 %v2627, %v2647
    %v2664 = vadd.f32 %v2628, %v2647
    %v2665 = vadd.f32 %v2629, %v2647
    %v2666 = vadd.f32 %v2630, %v2647
    %v2667 = vadd.f32 %v2631, %v2647
    %v2668 = vadd.f32 %v2632, %v2647
    %v2669 = vadd.f32 %v2633, %v2647
    %v2670 = vadd.f32 %v2634, %v2647
    %v2671 = vadd.f32 %v2635, %v2647
    %v2672 = vadd.f32 %v2636, %v2647
    %v2673 = vadd.f32 %v2637, %v2647
    %v2674 = vadd.f32 %v2638, %v2647
    %v2675 = vadd.f32 %v2639, %v2647
    %v2676 = vadd.f32 %v2640, %v2647
    %v2677 = vadd.f32 %v2641, %v2647
    %v2678 = vadd.f32 %v2642, %v2647
    %v2679 = vadd.f32 %v2643, %v2647
    %v2680 = vadd.f32 %v2644, %v2647
    %vm2681 = vcmask 23552
    %2682 = vst.msk [vmem:[%s11] sm:$0xff] %vm2681, %v2649
    %2683 = vst.msk [vmem:[%s11 + $0x8] sm:$0xff] %vm2681, %v2650
    %2684 = vst.msk [vmem:[%s11 + $0x10] sm:$0xff] %vm2681, %v2651
    %2685 = vst.msk [vmem:[%s11 + $0x18] sm:$0xff] %vm2681, %v2652
    %2686 = vst.msk [vmem:[%s11 + $0x20] sm:$0xff] %vm2681, %v2653
    %2687 = vst.msk [vmem:[%s11 + $0x28] sm:$0xff] %vm2681, %v2654
    %2688 = vst.msk [vmem:[%s11 + $0x30] sm:$0xff] %vm2681, %v2655
    %2689 = vst.msk [vmem:[%s11 + $0x38] sm:$0xff] %vm2681, %v2656
    %2690 = vst.msk [vmem:[%s11 + $0x40] sm:$0xff] %vm2681, %v2657
    %2691 = vst.msk [vmem:[%s11 + $0x48] sm:$0xff] %vm2681, %v2658
    %2692 = vst.msk [vmem:[%s11 + $0x50] sm:$0xff] %vm2681, %v2659
    %2693 = vst.msk [vmem:[%s11 + $0x58] sm:$0xff] %vm2681, %v2660
    %2694 = vst.msk [vmem:[%s11 + $0x60] sm:$0xff] %vm2681, %v2661
    %2695 = vst.msk [vmem:[%s11 + $0x68] sm:$0xff] %vm2681, %v2662
    %2696 = vst.msk [vmem:[%s11 + $0x70] sm:$0xff] %vm2681, %v2663
    %2697 = vst.msk [vmem:[%s11 + $0x78] sm:$0xff] %vm2681, %v2664
    %2698 = vst.msk [vmem:[%s11 + $0x80] sm:$0xff] %vm2681, %v2665
    %2699 = vst.msk [vmem:[%s11 + $0x88] sm:$0xff] %vm2681, %v2666
    %2700 = vst.msk [vmem:[%s11 + $0x90] sm:$0xff] %vm2681, %v2667
    %2701 = vst.msk [vmem:[%s11 + $0x98] sm:$0xff] %vm2681, %v2668
    %2702 = vst.msk [vmem:[%s11 + $0xa0] sm:$0xff] %vm2681, %v2669
    %2703 = vst.msk [vmem:[%s11 + $0xa8] sm:$0xff] %vm2681, %v2670
    %2704 = vst.msk [vmem:[%s11 + $0xb0] sm:$0xff] %vm2681, %v2671
    %2705 = vst.msk [vmem:[%s11 + $0xb8] sm:$0xff] %vm2681, %v2672
    %2706 = vst.msk [vmem:[%s11 + $0xc0] sm:$0xff] %vm2681, %v2673
    %2707 = vst.msk [vmem:[%s11 + $0xc8] sm:$0xff] %vm2681, %v2674
    %2708 = vst.msk [vmem:[%s11 + $0xd0] sm:$0xff] %vm2681, %v2675
    %2709 = vst.msk [vmem:[%s11 + $0xd8] sm:$0xff] %vm2681, %v2676
    %2710 = vst.msk [vmem:[%s11 + $0xe0] sm:$0xff] %vm2681, %v2677
    %2711 = vst.msk [vmem:[%s11 + $0xe8] sm:$0xff] %vm2681, %v2678
    %2712 = vst.msk [vmem:[%s11 + $0xf0] sm:$0xff] %vm2681, %v2679
    %2713 = vst.msk [vmem:[%s11 + $0xf8] sm:$0xff] %vm2681, %v2680
    // Predicated region
    $region70: #{tpu_custom_call.1} parent=1 // pred_check
      _
    $region71: #{tpu_custom_call.1} parent=1 // pred_check_branch
      %2715 = sbr.rel (0) target = $region73
    $region72: #{tpu_custom_call.1} parent=1 // pred_region
      _
    $region73: #{tpu_custom_call.1} parent=1 // pred_fallthru
      _
    // Predicated region
    $region74: #{tpu_custom_call.1} parent=1 // pred_check
      _
    $region75: #{tpu_custom_call.1} parent=1 // pred_check_branch
      %2717 = sbr.rel (0) target = $region77
    $region76: #{tpu_custom_call.1} parent=1 // pred_region
      _
    $region77: #{tpu_custom_call.1} parent=1 // pred_fallthru
      _
    %2718 = vsyncpa [#allocation3], 1
    %2719 = vsyncpa [#allocation5], 1
    %2720 = vsyncpa [#allocation8], 1
    %2721 = vsyncpa [#allocation11], 1

</llo_original>
